<compile_context>
chip_gen: v6e
topology: v6e:2x2x1
jax: 0.10.0
libtpu: 0.0.40
codegen_flags: <defaults>
</compile_context>

<pallas_src>
import functools

import jax
import jax.numpy as jnp
import jax.scipy.linalg as jsp_linalg
from jax.experimental import pallas as pl
from jax.experimental.pallas import tpu as pltpu


# Set to jnp.bfloat16 on v6e/v7x to use the fast MXU path and halve the
# adjacency/weight VMEM + DMA footprint (accumulation stays f32).  Kept f32 by
# default to match the PyTorch reference numerics.
MXU_DTYPE = jnp.float32


# ----------------------------- fused flow kernel --------------------------- #

def _nf_flow_kernel(adj_ref, x_ref, *refs, num_layers, num_steps, half):
    """Whole flow in one invocation.

    adj_ref : (N, N)   symmetrically-normalized adjacency (symmetric!)
    x_ref   : (feat,N) transposed node features; rows [:half]=x0^T, [half:]=x1^T
    refs    : num_layers weight stacks (2T, f_out, f_in)  [already transposed],
              num_layers bias   stacks (2T, f_out, 1),
              out_ref (feat, N), ldj_ref (1, 1)
    """
    w_refs = refs[:num_layers]
    b_refs = refs[num_layers:2 * num_layers]
    out_ref = refs[2 * num_layers]
    ldj_ref = refs[2 * num_layers + 1]

    adj = adj_ref[...].astype(MXU_DTYPE)          # (N, N), resident in VMEM
    x0 = x_ref[:half, :]                          # (half, N)
    x1 = x_ref[half:, :]                          # (half, N)
    ldj_acc = jnp.zeros_like(x0)                  # element-wise ldj accumulator

    for step in range(num_steps):                 # 2*T couplings, unrolled
        h = x0 if step % 2 == 0 else x1
        # fused s|t GCN: per layer  h' = (W_fused^T @ h) @ A_hat + b_fused
        # (layer 0: [Ws|Wt]; deeper layers: block_diag(Ws, Wt)); ReLU between
        # layers, none after the last (torch_geometric.models.GCN semantics).
        for li in range(num_layers):
            w_t = w_refs[li][step].astype(MXU_DTYPE)     # (f_out, f_in)
            b = b_refs[li][step]                         # (f_out, 1)
            hw = jnp.dot(w_t, h.astype(MXU_DTYPE),
                         preferred_element_type=jnp.float32)
            h = jnp.dot(hw.astype(MXU_DTYPE), adj,
                        preferred_element_type=jnp.float32) + b
            if li < num_layers - 1:
                h = jnp.maximum(h, 0.0)

        s = jax.nn.sigmoid(h[:half, :])           # sublane-aligned split
        t = jax.nn.sigmoid(h[half:, :])
        ldj_acc = ldj_acc + s
        if step % 2 == 0:                         # even: read x0, update x1
            x1 = x1 * jnp.exp(s) + t
        else:                                     # odd : read x1, update x0
            x0 = x0 * jnp.exp(s) + t

    # Two sublane-aligned slice stores (no in-kernel concatenate / relayout).
    out_ref[:half, :] = x0.astype(out_ref.dtype)
    out_ref[half:, :] = x1.astype(out_ref.dtype)
    # Single cross-lane reduction + single (1,1) store at the very end.
    ldj_ref[...] = jnp.sum(ldj_acc).reshape(1, 1)


@jax.jit
def nf_forward(x, adj, weights_t, biases_t):
    """Run the whole NF.F flow (all timesteps) in one fused Pallas kernel."""
    n, feat = x.shape
    half = feat // 2
    num_layers = len(weights_t)
    num_steps = weights_t[0].shape[0]             # 2 * num_timesteps

    # Lane-dense transposed layout: features on sublanes, nodes on lanes.
    xt = x.T                                      # (feat, N)

    kernel = functools.partial(
        _nf_flow_kernel, num_layers=num_layers, num_steps=num_steps, half=half)

    # Explicit VMEM budget: adjacency + in/out features + all weight stacks,
    # with 2x headroom (everything is resident; there is no pipelining).
    resident_f32 = (adj.size + 2 * xt.size
                    + sum(w.size for w in weights_t)
                    + sum(b.size for b in biases_t) + 1)
    vmem_limit = int(min(128 << 20, max(32 << 20, 8 * resident_f32 + (4 << 20))))

    zt, ldj = pl.pallas_call(
        kernel,
        out_shape=(
            jax.ShapeDtypeStruct((feat, n), jnp.float32),   # transposed x0|x1
            jax.ShapeDtypeStruct((1, 1), jnp.float32),      # log-det-Jacobian
        ),
        compiler_params=pltpu.CompilerParams(vmem_limit_bytes=vmem_limit),
    )(adj, xt, *weights_t, *biases_t)

    return zt.T, ldj[0, 0]


# ------------------------------ glue / model ------------------------------- #

def normalized_adjacency(edge_index, num_nodes):
    """GCN normalization: D^{-1/2} (A + I) D^{-1/2} (dense, small graphs).

    The result is symmetric for undirected graphs, which the kernel's
    transposed formulation (h @ A == (A @ h^T)^T) relies on.
    """
    src, dst = edge_index[0], edge_index[1]
    a = jnp.zeros((num_nodes, num_nodes), jnp.float32).at[src, dst].set(1.0)
    a = a + jnp.eye(num_nodes, dtype=jnp.float32)
    deg = jnp.sum(a, axis=1)
    dinv = jax.lax.rsqrt(deg)
    return dinv[:, None] * a * dinv[None, :]


def init_gcn_params(key, in_dim, hidden_dim, out_dim, num_layers):
    if num_layers == 1:
        dims = [(in_dim, out_dim)]
    else:
        dims = ([(in_dim, hidden_dim)]
                + [(hidden_dim, hidden_dim)] * (num_layers - 2)
                + [(hidden_dim, out_dim)])
    params = []
    for fi, fo in dims:
        key, k1 = jax.random.split(key)
        limit = (6.0 / (fi + fo)) ** 0.5          # glorot-uniform
        w = jax.random.uniform(k1, (fi, fo), jnp.float32, -limit, limit)
        b = jnp.zeros((fo,), jnp.float32)
        params.append((w, b))
    return params, key


def _fuse_st_params_transposed(s_params, t_params):
    """Fuse one coupling's s/t GCN weights and pre-transpose for (F, N) math.

    Layer 0: W = [Ws | Wt] (concat on output dim); deeper layers:
    W = block_diag(Ws, Wt).  Returned as (W^T, b[:, None]) so the kernel
    computes h' = W^T @ h @ A_hat directly in the transposed layout.
    """
    fused = []
    for li, ((ws, bs), (wt, bt)) in enumerate(zip(s_params, t_params)):
        if li == 0:
            w = jnp.concatenate([ws, wt], axis=1)
        else:
            w = jsp_linalg.block_diag(ws, wt)
        b = jnp.concatenate([bs, bt], axis=0).reshape(-1, 1)
        fused.append((w.T, b))
    return fused


class NFPallas:
    """JAX/Pallas port of NF (use_batch_norm=False, weight_sharing=False)."""

    def __init__(self, key, num_timesteps, num_layer, feat_dim, hidden_dim):
        assert feat_dim % 2 == 0
        self.num_timesteps = num_timesteps
        half = feat_dim // 2
        # per-network GCN parameters: self.s[k][i], self.t[k][i], k in {0,1}
        self.s = [[], []]
        self.t = [[], []]
        for k in range(2):
            for _ in range(num_timesteps):
                p, key = init_gcn_params(key, half, hidden_dim, half, num_layer)
                self.s[k].append(p)
                p, key = init_gcn_params(key, half, hidden_dim, half, num_layer)
                self.t[k].append(p)
        # TODO(synk): pyro BatchNorm transforms (self.bns) unused when
        # use_batch_norm=False; not implemented.

        # Pack the 2*T couplings' fused, transposed s|t weights into per-layer
        # stacks with a leading (2*T) step axis; step j = 2*i + k uses
        # (s[k][i], t[k][i]).  All stacks are VMEM-resident in the kernel.
        per_step = []
        for i in range(num_timesteps):
            for k in range(2):
                per_step.append(
                    _fuse_st_params_transposed(self.s[k][i], self.t[k][i]))
        n_steps = 2 * num_timesteps
        self.weights = tuple(
            jnp.stack([per_step[j][li][0] for j in range(n_steps)], axis=0)
            for li in range(num_layer))
        self.biases = tuple(
            jnp.stack([per_step[j][li][1] for j in range(n_steps)], axis=0)
            for li in range(num_layer))

    def F(self, data, adj):
        """Forward flow; `adj` is the precomputed normalized adjacency."""
        return nf_forward(data, adj, self.weights, self.biases)

    def __call__(self, x, edge_index, inverse=True):
        # TODO(synk): inverse direction G (sampling path) not implemented;
        # forward default (inverse=True) dispatches to F, as in the reference.
        assert inverse, "only the F direction (inverse=True) is implemented"
        adj = normalized_adjacency(edge_index, x.shape[0])
        return self.F(x, adj)


# ---------------------------------- main ----------------------------------- #

if __name__ == "__main__":
    key = jax.random.PRNGKey(0)

    # synthetic "args"
    num_timesteps = 2     # args.num_timesteps
    num_layer = 2         # args.num_layer
    hidden_dim1 = 32      # args.hidden_dim1
    output_dim = 16       # args.output_dim  (node feature dim; halves of 8)
    num_nodes = 16

    key, k_model, k_x = jax.random.split(key, 3)
    model = NFPallas(k_model, num_timesteps, num_layer, output_dim, hidden_dim1)

    # node features (N, output_dim)
    x = jax.random.normal(k_x, (num_nodes, output_dim), jnp.float32)

    # bidirectional ring graph, edge_index shape (2, 2N)
    idx = jnp.arange(num_nodes, dtype=jnp.int32)
    nxt = (idx + 1) % num_nodes
    edge_index = jnp.stack(
        [jnp.concatenate([idx, nxt]), jnp.concatenate([nxt, idx])], axis=0
    )

    # Adjacency normalization is hoisted out: computed once per graph, reused
    # across calls of the jitted fused flow.
    adj = normalized_adjacency(edge_index, num_nodes)

    z, log_det_jacobian = model.F(x, adj)
    jax.block_until_ready(z)
    jax.block_until_ready(log_det_jacobian)

    assert z.shape == (num_nodes, output_dim)
    assert log_det_jacobian.shape == ()
    print("KERNEL_OK")
</pallas_src>

<mosaic_0001>
module attributes {stable_mosaic.version = 11 : i64} {
  func.func @_nf_flow_kernel(%arg0: memref<16x16xf32, #tpu.memory_space<vmem>>, %arg1: memref<16x16xf32, #tpu.memory_space<vmem>>, %arg2: memref<4x64x8xf32, #tpu.memory_space<vmem>>, %arg3: memref<4x16x64xf32, #tpu.memory_space<vmem>>, %arg4: memref<4x64x1xf32, #tpu.memory_space<vmem>>, %arg5: memref<4x16x1xf32, #tpu.memory_space<vmem>>, %arg6: memref<16x16xf32, #tpu.memory_space<vmem>>, %arg7: memref<1x1xf32, #tpu.memory_space<vmem>>) attributes {dimension_semantics = [], scalar_prefetch = 0 : i64, scratch_operands = 0 : i64, tpu.core_type = #tpu.core_type<tc>} {
    %c0 = arith.constant 0 : index
    %c0_0 = arith.constant 0 : index
    %0 = vector.load %arg0[%c0, %c0_0] : memref<16x16xf32, #tpu.memory_space<vmem>>, vector<16x16xf32>
    %c0_1 = arith.constant 0 : index
    %c0_2 = arith.constant 0 : index
    %1 = vector.load %arg1[%c0_1, %c0_2] : memref<16x16xf32, #tpu.memory_space<vmem>>, vector<8x16xf32>
    %c8 = arith.constant 8 : index
    %c0_3 = arith.constant 0 : index
    %2 = vector.load %arg1[%c8, %c0_3] : memref<16x16xf32, #tpu.memory_space<vmem>>, vector<8x16xf32>
    %cst = arith.constant 0.000000e+00 : f32
    %3 = vector.broadcast %cst : f32 to vector<8x16xf32>
    %c0_4 = arith.constant 0 : index
    %c0_5 = arith.constant 0 : index
    %c0_6 = arith.constant 0 : index
    %4 = vector.load %arg2[%c0_4, %c0_5, %c0_6] : memref<4x64x8xf32, #tpu.memory_space<vmem>>, vector<1x64x8xf32>
    %5 = vector.shape_cast %4 : vector<1x64x8xf32> to vector<64x8xf32>
    %c0_7 = arith.constant 0 : index
    %c0_8 = arith.constant 0 : index
    %c0_9 = arith.constant 0 : index
    %6 = vector.load %arg4[%c0_7, %c0_8, %c0_9] : memref<4x64x1xf32, #tpu.memory_space<vmem>>, vector<1x64x1xf32>
    %7 = vector.shape_cast %6 : vector<1x64x1xf32> to vector<64x1xf32>
    %cst_10 = arith.constant dense<0.000000e+00> : vector<64x16xf32>
    %8 = tpu.matmul %5, %1, %cst_10 {dimension_numbers = #tpu.dot_dimension_numbers<[1], [0], [0], [1], [0, 0, 1, 1], [], []>} : vector<64x8xf32>, vector<8x16xf32>, vector<64x16xf32> -> vector<64x16xf32>
    %cst_11 = arith.constant dense<0.000000e+00> : vector<64x16xf32>
    %9 = tpu.matmul %8, %0, %cst_11 {dimension_numbers = #tpu.dot_dimension_numbers<[1], [0], [0], [1], [0, 0, 1, 1], [], []>} : vector<64x16xf32>, vector<16x16xf32>, vector<64x16xf32> -> vector<64x16xf32>
    %10 = vector.broadcast %7 : vector<64x1xf32> to vector<64x16xf32>
    %11 = arith.addf %9, %10 : vector<64x16xf32>
    %cst_12 = arith.constant 0.000000e+00 : f32
    %12 = vector.broadcast %cst_12 : f32 to vector<64x16xf32>
    %13 = arith.maximumf %11, %12 : vector<64x16xf32>
    %c0_13 = arith.constant 0 : index
    %c0_14 = arith.constant 0 : index
    %c0_15 = arith.constant 0 : index
    %14 = vector.load %arg3[%c0_13, %c0_14, %c0_15] : memref<4x16x64xf32, #tpu.memory_space<vmem>>, vector<1x16x64xf32>
    %15 = vector.shape_cast %14 : vector<1x16x64xf32> to vector<16x64xf32>
    %c0_16 = arith.constant 0 : index
    %c0_17 = arith.constant 0 : index
    %c0_18 = arith.constant 0 : index
    %16 = vector.load %arg5[%c0_16, %c0_17, %c0_18] : memref<4x16x1xf32, #tpu.memory_space<vmem>>, vector<1x16x1xf32>
    %17 = vector.shape_cast %16 : vector<1x16x1xf32> to vector<16x1xf32>
    %cst_19 = arith.constant dense<0.000000e+00> : vector<16x16xf32>
    %18 = tpu.matmul %15, %13, %cst_19 {dimension_numbers = #tpu.dot_dimension_numbers<[1], [0], [0], [1], [0, 0, 1, 1], [], []>} : vector<16x64xf32>, vector<64x16xf32>, vector<16x16xf32> -> vector<16x16xf32>
    %cst_20 = arith.constant dense<0.000000e+00> : vector<16x16xf32>
    %19 = tpu.matmul %18, %0, %cst_20 {dimension_numbers = #tpu.dot_dimension_numbers<[1], [0], [0], [1], [0, 0, 1, 1], [], []>} : vector<16x16xf32>, vector<16x16xf32>, vector<16x16xf32> -> vector<16x16xf32>
    %20 = vector.broadcast %17 : vector<16x1xf32> to vector<16x16xf32>
    %21 = arith.addf %19, %20 : vector<16x16xf32>
    %22 = vector.extract_strided_slice %21 {offsets = [0, 0], sizes = [8, 16], strides = [1, 1]} : vector<16x16xf32> to vector<8x16xf32>
    %23 = arith.negf %22 : vector<8x16xf32>
    %24 = math.exp %23 : vector<8x16xf32>
    %cst_21 = arith.constant 1.000000e+00 : f32
    %25 = vector.broadcast %cst_21 : f32 to vector<8x16xf32>
    %26 = arith.addf %25, %24 : vector<8x16xf32>
    %27 = arith.divf %25, %26 : vector<8x16xf32>
    %28 = vector.extract_strided_slice %21 {offsets = [8, 0], sizes = [8, 16], strides = [1, 1]} : vector<16x16xf32> to vector<8x16xf32>
    %29 = arith.negf %28 : vector<8x16xf32>
    %30 = math.exp %29 : vector<8x16xf32>
    %cst_22 = arith.constant 1.000000e+00 : f32
    %31 = vector.broadcast %cst_22 : f32 to vector<8x16xf32>
    %32 = arith.addf %31, %30 : vector<8x16xf32>
    %33 = arith.divf %31, %32 : vector<8x16xf32>
    %34 = arith.addf %3, %27 : vector<8x16xf32>
    %35 = math.exp %27 : vector<8x16xf32>
    %36 = arith.mulf %2, %35 : vector<8x16xf32>
    %37 = arith.addf %36, %33 : vector<8x16xf32>
    %c1 = arith.constant 1 : index
    %c0_23 = arith.constant 0 : index
    %c0_24 = arith.constant 0 : index
    %38 = vector.load %arg2[%c1, %c0_23, %c0_24] : memref<4x64x8xf32, #tpu.memory_space<vmem>>, vector<1x64x8xf32>
    %39 = vector.shape_cast %38 : vector<1x64x8xf32> to vector<64x8xf32>
    %c1_25 = arith.constant 1 : index
    %c0_26 = arith.constant 0 : index
    %c0_27 = arith.constant 0 : index
    %40 = vector.load %arg4[%c1_25, %c0_26, %c0_27] : memref<4x64x1xf32, #tpu.memory_space<vmem>>, vector<1x64x1xf32>
    %41 = vector.shape_cast %40 : vector<1x64x1xf32> to vector<64x1xf32>
    %cst_28 = arith.constant dense<0.000000e+00> : vector<64x16xf32>
    %42 = tpu.matmul %39, %37, %cst_28 {dimension_numbers = #tpu.dot_dimension_numbers<[1], [0], [0], [1], [0, 0, 1, 1], [], []>} : vector<64x8xf32>, vector<8x16xf32>, vector<64x16xf32> -> vector<64x16xf32>
    %cst_29 = arith.constant dense<0.000000e+00> : vector<64x16xf32>
    %43 = tpu.matmul %42, %0, %cst_29 {dimension_numbers = #tpu.dot_dimension_numbers<[1], [0], [0], [1], [0, 0, 1, 1], [], []>} : vector<64x16xf32>, vector<16x16xf32>, vector<64x16xf32> -> vector<64x16xf32>
    %44 = vector.broadcast %41 : vector<64x1xf32> to vector<64x16xf32>
    %45 = arith.addf %43, %44 : vector<64x16xf32>
    %cst_30 = arith.constant 0.000000e+00 : f32
    %46 = vector.broadcast %cst_30 : f32 to vector<64x16xf32>
    %47 = arith.maximumf %45, %46 : vector<64x16xf32>
    %c1_31 = arith.constant 1 : index
    %c0_32 = arith.constant 0 : index
    %c0_33 = arith.constant 0 : index
    %48 = vector.load %arg3[%c1_31, %c0_32, %c0_33] : memref<4x16x64xf32, #tpu.memory_space<vmem>>, vector<1x16x64xf32>
    %49 = vector.shape_cast %48 : vector<1x16x64xf32> to vector<16x64xf32>
    %c1_34 = arith.constant 1 : index
    %c0_35 = arith.constant 0 : index
    %c0_36 = arith.constant 0 : index
    %50 = vector.load %arg5[%c1_34, %c0_35, %c0_36] : memref<4x16x1xf32, #tpu.memory_space<vmem>>, vector<1x16x1xf32>
    %51 = vector.shape_cast %50 : vector<1x16x1xf32> to vector<16x1xf32>
    %cst_37 = arith.constant dense<0.000000e+00> : vector<16x16xf32>
    %52 = tpu.matmul %49, %47, %cst_37 {dimension_numbers = #tpu.dot_dimension_numbers<[1], [0], [0], [1], [0, 0, 1, 1], [], []>} : vector<16x64xf32>, vector<64x16xf32>, vector<16x16xf32> -> vector<16x16xf32>
    %cst_38 = arith.constant dense<0.000000e+00> : vector<16x16xf32>
    %53 = tpu.matmul %52, %0, %cst_38 {dimension_numbers = #tpu.dot_dimension_numbers<[1], [0], [0], [1], [0, 0, 1, 1], [], []>} : vector<16x16xf32>, vector<16x16xf32>, vector<16x16xf32> -> vector<16x16xf32>
    %54 = vector.broadcast %51 : vector<16x1xf32> to vector<16x16xf32>
    %55 = arith.addf %53, %54 : vector<16x16xf32>
    %56 = vector.extract_strided_slice %55 {offsets = [0, 0], sizes = [8, 16], strides = [1, 1]} : vector<16x16xf32> to vector<8x16xf32>
    %57 = arith.negf %56 : vector<8x16xf32>
    %58 = math.exp %57 : vector<8x16xf32>
    %cst_39 = arith.constant 1.000000e+00 : f32
    %59 = vector.broadcast %cst_39 : f32 to vector<8x16xf32>
    %60 = arith.addf %59, %58 : vector<8x16xf32>
    %61 = arith.divf %59, %60 : vector<8x16xf32>
    %62 = vector.extract_strided_slice %55 {offsets = [8, 0], sizes = [8, 16], strides = [1, 1]} : vector<16x16xf32> to vector<8x16xf32>
    %63 = arith.negf %62 : vector<8x16xf32>
    %64 = math.exp %63 : vector<8x16xf32>
    %cst_40 = arith.constant 1.000000e+00 : f32
    %65 = vector.broadcast %cst_40 : f32 to vector<8x16xf32>
    %66 = arith.addf %65, %64 : vector<8x16xf32>
    %67 = arith.divf %65, %66 : vector<8x16xf32>
    %68 = arith.addf %34, %61 : vector<8x16xf32>
    %69 = math.exp %61 : vector<8x16xf32>
    %70 = arith.mulf %1, %69 : vector<8x16xf32>
    %71 = arith.addf %70, %67 : vector<8x16xf32>
    %c2 = arith.constant 2 : index
    %c0_41 = arith.constant 0 : index
    %c0_42 = arith.constant 0 : index
    %72 = vector.load %arg2[%c2, %c0_41, %c0_42] : memref<4x64x8xf32, #tpu.memory_space<vmem>>, vector<1x64x8xf32>
    %73 = vector.shape_cast %72 : vector<1x64x8xf32> to vector<64x8xf32>
    %c2_43 = arith.constant 2 : index
    %c0_44 = arith.constant 0 : index
    %c0_45 = arith.constant 0 : index
    %74 = vector.load %arg4[%c2_43, %c0_44, %c0_45] : memref<4x64x1xf32, #tpu.memory_space<vmem>>, vector<1x64x1xf32>
    %75 = vector.shape_cast %74 : vector<1x64x1xf32> to vector<64x1xf32>
    %cst_46 = arith.constant dense<0.000000e+00> : vector<64x16xf32>
    %76 = tpu.matmul %73, %71, %cst_46 {dimension_numbers = #tpu.dot_dimension_numbers<[1], [0], [0], [1], [0, 0, 1, 1], [], []>} : vector<64x8xf32>, vector<8x16xf32>, vector<64x16xf32> -> vector<64x16xf32>
    %cst_47 = arith.constant dense<0.000000e+00> : vector<64x16xf32>
    %77 = tpu.matmul %76, %0, %cst_47 {dimension_numbers = #tpu.dot_dimension_numbers<[1], [0], [0], [1], [0, 0, 1, 1], [], []>} : vector<64x16xf32>, vector<16x16xf32>, vector<64x16xf32> -> vector<64x16xf32>
    %78 = vector.broadcast %75 : vector<64x1xf32> to vector<64x16xf32>
    %79 = arith.addf %77, %78 : vector<64x16xf32>
    %cst_48 = arith.constant 0.000000e+00 : f32
    %80 = vector.broadcast %cst_48 : f32 to vector<64x16xf32>
    %81 = arith.maximumf %79, %80 : vector<64x16xf32>
    %c2_49 = arith.constant 2 : index
    %c0_50 = arith.constant 0 : index
    %c0_51 = arith.constant 0 : index
    %82 = vector.load %arg3[%c2_49, %c0_50, %c0_51] : memref<4x16x64xf32, #tpu.memory_space<vmem>>, vector<1x16x64xf32>
    %83 = vector.shape_cast %82 : vector<1x16x64xf32> to vector<16x64xf32>
    %c2_52 = arith.constant 2 : index
    %c0_53 = arith.constant 0 : index
    %c0_54 = arith.constant 0 : index
    %84 = vector.load %arg5[%c2_52, %c0_53, %c0_54] : memref<4x16x1xf32, #tpu.memory_space<vmem>>, vector<1x16x1xf32>
    %85 = vector.shape_cast %84 : vector<1x16x1xf32> to vector<16x1xf32>
    %cst_55 = arith.constant dense<0.000000e+00> : vector<16x16xf32>
    %86 = tpu.matmul %83, %81, %cst_55 {dimension_numbers = #tpu.dot_dimension_numbers<[1], [0], [0], [1], [0, 0, 1, 1], [], []>} : vector<16x64xf32>, vector<64x16xf32>, vector<16x16xf32> -> vector<16x16xf32>
    %cst_56 = arith.constant dense<0.000000e+00> : vector<16x16xf32>
    %87 = tpu.matmul %86, %0, %cst_56 {dimension_numbers = #tpu.dot_dimension_numbers<[1], [0], [0], [1], [0, 0, 1, 1], [], []>} : vector<16x16xf32>, vector<16x16xf32>, vector<16x16xf32> -> vector<16x16xf32>
    %88 = vector.broadcast %85 : vector<16x1xf32> to vector<16x16xf32>
    %89 = arith.addf %87, %88 : vector<16x16xf32>
    %90 = vector.extract_strided_slice %89 {offsets = [0, 0], sizes = [8, 16], strides = [1, 1]} : vector<16x16xf32> to vector<8x16xf32>
    %91 = arith.negf %90 : vector<8x16xf32>
    %92 = math.exp %91 : vector<8x16xf32>
    %cst_57 = arith.constant 1.000000e+00 : f32
    %93 = vector.broadcast %cst_57 : f32 to vector<8x16xf32>
    %94 = arith.addf %93, %92 : vector<8x16xf32>
    %95 = arith.divf %93, %94 : vector<8x16xf32>
    %96 = vector.extract_strided_slice %89 {offsets = [8, 0], sizes = [8, 16], strides = [1, 1]} : vector<16x16xf32> to vector<8x16xf32>
    %97 = arith.negf %96 : vector<8x16xf32>
    %98 = math.exp %97 : vector<8x16xf32>
    %cst_58 = arith.constant 1.000000e+00 : f32
    %99 = vector.broadcast %cst_58 : f32 to vector<8x16xf32>
    %100 = arith.addf %99, %98 : vector<8x16xf32>
    %101 = arith.divf %99, %100 : vector<8x16xf32>
    %102 = arith.addf %68, %95 : vector<8x16xf32>
    %103 = math.exp %95 : vector<8x16xf32>
    %104 = arith.mulf %37, %103 : vector<8x16xf32>
    %105 = arith.addf %104, %101 : vector<8x16xf32>
    %c3 = arith.constant 3 : index
    %c0_59 = arith.constant 0 : index
    %c0_60 = arith.constant 0 : index
    %106 = vector.load %arg2[%c3, %c0_59, %c0_60] : memref<4x64x8xf32, #tpu.memory_space<vmem>>, vector<1x64x8xf32>
    %107 = vector.shape_cast %106 : vector<1x64x8xf32> to vector<64x8xf32>
    %c3_61 = arith.constant 3 : index
    %c0_62 = arith.constant 0 : index
    %c0_63 = arith.constant 0 : index
    %108 = vector.load %arg4[%c3_61, %c0_62, %c0_63] : memref<4x64x1xf32, #tpu.memory_space<vmem>>, vector<1x64x1xf32>
    %109 = vector.shape_cast %108 : vector<1x64x1xf32> to vector<64x1xf32>
    %cst_64 = arith.constant dense<0.000000e+00> : vector<64x16xf32>
    %110 = tpu.matmul %107, %105, %cst_64 {dimension_numbers = #tpu.dot_dimension_numbers<[1], [0], [0], [1], [0, 0, 1, 1], [], []>} : vector<64x8xf32>, vector<8x16xf32>, vector<64x16xf32> -> vector<64x16xf32>
    %cst_65 = arith.constant dense<0.000000e+00> : vector<64x16xf32>
    %111 = tpu.matmul %110, %0, %cst_65 {dimension_numbers = #tpu.dot_dimension_numbers<[1], [0], [0], [1], [0, 0, 1, 1], [], []>} : vector<64x16xf32>, vector<16x16xf32>, vector<64x16xf32> -> vector<64x16xf32>
    %112 = vector.broadcast %109 : vector<64x1xf32> to vector<64x16xf32>
    %113 = arith.addf %111, %112 : vector<64x16xf32>
    %cst_66 = arith.constant 0.000000e+00 : f32
    %114 = vector.broadcast %cst_66 : f32 to vector<64x16xf32>
    %115 = arith.maximumf %113, %114 : vector<64x16xf32>
    %c3_67 = arith.constant 3 : index
    %c0_68 = arith.constant 0 : index
    %c0_69 = arith.constant 0 : index
    %116 = vector.load %arg3[%c3_67, %c0_68, %c0_69] : memref<4x16x64xf32, #tpu.memory_space<vmem>>, vector<1x16x64xf32>
    %117 = vector.shape_cast %116 : vector<1x16x64xf32> to vector<16x64xf32>
    %c3_70 = arith.constant 3 : index
    %c0_71 = arith.constant 0 : index
    %c0_72 = arith.constant 0 : index
    %118 = vector.load %arg5[%c3_70, %c0_71, %c0_72] : memref<4x16x1xf32, #tpu.memory_space<vmem>>, vector<1x16x1xf32>
    %119 = vector.shape_cast %118 : vector<1x16x1xf32> to vector<16x1xf32>
    %cst_73 = arith.constant dense<0.000000e+00> : vector<16x16xf32>
    %120 = tpu.matmul %117, %115, %cst_73 {dimension_numbers = #tpu.dot_dimension_numbers<[1], [0], [0], [1], [0, 0, 1, 1], [], []>} : vector<16x64xf32>, vector<64x16xf32>, vector<16x16xf32> -> vector<16x16xf32>
    %cst_74 = arith.constant dense<0.000000e+00> : vector<16x16xf32>
    %121 = tpu.matmul %120, %0, %cst_74 {dimension_numbers = #tpu.dot_dimension_numbers<[1], [0], [0], [1], [0, 0, 1, 1], [], []>} : vector<16x16xf32>, vector<16x16xf32>, vector<16x16xf32> -> vector<16x16xf32>
    %122 = vector.broadcast %119 : vector<16x1xf32> to vector<16x16xf32>
    %123 = arith.addf %121, %122 : vector<16x16xf32>
    %124 = vector.extract_strided_slice %123 {offsets = [0, 0], sizes = [8, 16], strides = [1, 1]} : vector<16x16xf32> to vector<8x16xf32>
    %125 = arith.negf %124 : vector<8x16xf32>
    %126 = math.exp %125 : vector<8x16xf32>
    %cst_75 = arith.constant 1.000000e+00 : f32
    %127 = vector.broadcast %cst_75 : f32 to vector<8x16xf32>
    %128 = arith.addf %127, %126 : vector<8x16xf32>
    %129 = arith.divf %127, %128 : vector<8x16xf32>
    %130 = vector.extract_strided_slice %123 {offsets = [8, 0], sizes = [8, 16], strides = [1, 1]} : vector<16x16xf32> to vector<8x16xf32>
    %131 = arith.negf %130 : vector<8x16xf32>
    %132 = math.exp %131 : vector<8x16xf32>
    %cst_76 = arith.constant 1.000000e+00 : f32
    %133 = vector.broadcast %cst_76 : f32 to vector<8x16xf32>
    %134 = arith.addf %133, %132 : vector<8x16xf32>
    %135 = arith.divf %133, %134 : vector<8x16xf32>
    %136 = arith.addf %102, %129 : vector<8x16xf32>
    %137 = math.exp %129 : vector<8x16xf32>
    %138 = arith.mulf %71, %137 : vector<8x16xf32>
    %139 = arith.addf %138, %135 : vector<8x16xf32>
    %c0_77 = arith.constant 0 : index
    %c0_78 = arith.constant 0 : index
    %140 = vector.load %arg6[%c0_77, %c0_78] : memref<16x16xf32, #tpu.memory_space<vmem>>, vector<8x16xf32>
    tpu.vector_store %arg6[%c0_77, %c0_78], %139 {strides = array<i32>} : memref<16x16xf32, #tpu.memory_space<vmem>>, vector<8x16xf32>,
    %c8_79 = arith.constant 8 : index
    %c0_80 = arith.constant 0 : index
    %141 = vector.load %arg6[%c8_79, %c0_80] : memref<16x16xf32, #tpu.memory_space<vmem>>, vector<8x16xf32>
    tpu.vector_store %arg6[%c8_79, %c0_80], %105 {strides = array<i32>} : memref<16x16xf32, #tpu.memory_space<vmem>>, vector<8x16xf32>,
    %142 = vector.shape_cast %136 : vector<8x16xf32> to vector<1x8x16xf32>
    %cst_81 = arith.constant dense<0.000000e+00> : vector<1xf32>
    %143 = vector.multi_reduction <add>, %142, %cst_81 [1, 2] : vector<1x8x16xf32> to vector<1xf32>
    %144 = vector.shape_cast %143 : vector<1xf32> to vector<1x1x1xf32>
    %145 = vector.extract %144[0, 0, 0] : f32 from vector<1x1x1xf32>
    %146 = vector.broadcast %145 : f32 to vector<1x1xf32>
    %c0_82 = arith.constant 0 : index
    %c0_83 = arith.constant 0 : index
    %147 = vector.load %arg7[%c0_82, %c0_83] : memref<1x1xf32, #tpu.memory_space<vmem>>, vector<1x1xf32>
    tpu.vector_store %arg7[%c0_82, %c0_83], %146 {strides = array<i32>} : memref<1x1xf32, #tpu.memory_space<vmem>>, vector<1x1xf32>,
    return
  }
}

</mosaic_0001>

<llo_original>
// kernel: nf_forward.1
$region0: #{nf_forward.1}
  #allocation0 [shape = 'u32[]', space=smem, size = 0x4, offset = 0x4, fixed_abs, tag = 'smem constant byte address 0x4 - core index']
  #allocation1 [shape = 'u32[144,128]{1,0:T(1,128)}', space=vmem, size = 0x12000, scoped, tag = 'internal scratch']
  %s0 = inlined_call_operand.vmem [shape: f32[16,16], index: 0, kind: input, shape index: {}]
  %s1 = inlined_call_operand.vmem [shape: f32[16,16], index: 1, kind: input, shape index: {}]
  %s2 = inlined_call_operand.vmem [shape: f32[4,64,8], index: 2, kind: input, shape index: {}]
  %s3 = inlined_call_operand.vmem [shape: f32[4,16,64], index: 3, kind: input, shape index: {}]
  %s4 = inlined_call_operand.vmem [shape: f32[4,64,1], index: 4, kind: input, shape index: {}]
  %s5 = inlined_call_operand.vmem [shape: f32[4,16,1], index: 5, kind: input, shape index: {}]
  %s6 = inlined_call_operand.vmem [shape: f32[16,16], index: 6, kind: output, shape index: {0}]
  %s7 = inlined_call_operand.hbm [shape: f32[1,1], index: 7, kind: output, shape index: {1}]
  %8 = xla_tuple %s6, %s7
  %s9 = sld [smem:[#allocation0]]
  $region42: #{nf_forward.1} parent=0
    _
  %s11 = ssub.s32 1, %s9
  %s12 = scalar_select 0, %s11, %s9
  $region1: #{nf_forward.1} parent=0
    #allocation2 [shape = 'u8[512]{0}', space=vmem, size = 0x400, scoped, tag = 'output window, operand 1, single buffered']
    #allocation3 [shape = 's32[1]{0}', space=sflag, size = 0x4, scoped, tag = 'scoped memory for nf_forward.1']
    %13 = vsyncpa [#allocation3], 0
    // Predicated region
    $region2: #{nf_forward.1} parent=1 // pred_check
      _
    $region3: #{nf_forward.1} parent=1 // pred_check_branch
      %15 = sbr.rel (0) target = $region5
    $region4: #{nf_forward.1} parent=1 // pred_region
      _
    $region5: #{nf_forward.1} parent=1 // pred_fallthru
      _
    // Predicated region
    $region6: #{nf_forward.1} parent=1 // pred_check
      _
    $region7: #{nf_forward.1} parent=1 // pred_check_branch
      %17 = sbr.rel (0) target = $region9
    $region8: #{nf_forward.1} parent=1 // pred_region
      _
    $region9: #{nf_forward.1} parent=1 // pred_fallthru
      _
    // Predicated region
    $region10: #{nf_forward.1} parent=1 // pred_check
      _
    $region11: #{nf_forward.1} parent=1 // pred_check_branch
      %19 = sbr.rel (0) target = $region13
    $region12: #{nf_forward.1} parent=1 // pred_region
      _
    $region13: #{nf_forward.1} parent=1 // pred_fallthru
      _
    // Predicated region
    $region14: #{nf_forward.1} parent=1 // pred_check
      _
    $region15: #{nf_forward.1} parent=1 // pred_check_branch
      %21 = sbr.rel (0) target = $region17
    $region16: #{nf_forward.1} parent=1 // pred_region
      _
    $region17: #{nf_forward.1} parent=1 // pred_fallthru
      _
    // Predicated region
    $region18: #{nf_forward.1} parent=1 // pred_check
      _
    $region19: #{nf_forward.1} parent=1 // pred_check_branch
      %23 = sbr.rel (0) target = $region21
    $region20: #{nf_forward.1} parent=1 // pred_region
      _
    $region21: #{nf_forward.1} parent=1 // pred_fallthru
      _
    // Predicated region
    $region22: #{nf_forward.1} parent=1 // pred_check
      _
    $region23: #{nf_forward.1} parent=1 // pred_check_branch
      %25 = sbr.rel (0) target = $region25
    $region24: #{nf_forward.1} parent=1 // pred_region
      _
    $region25: #{nf_forward.1} parent=1 // pred_fallthru
      _
    %v26 = vld [vmem:[%s0] sm:$0xff]
    %v27 = vld [vmem:[%s0 + $0x8] sm:$0xff]
    %v28 = vld [vmem:[%s1] sm:$0xff]
    %v29 = vld [vmem:[%s1 + $0x8] sm:$0xff]
    %v30 = vld [vmem:[%s2] sm:$0xff]
    %v31 = vld [vmem:[%s2 + $0x8] sm:$0xff]
    %v32 = vld [vmem:[%s2 + $0x10] sm:$0xff]
    %v33 = vld [vmem:[%s2 + $0x18] sm:$0xff]
    %v34 = vld [vmem:[%s2 + $0x20] sm:$0xff]
    %v35 = vld [vmem:[%s2 + $0x28] sm:$0xff]
    %v36 = vld [vmem:[%s2 + $0x30] sm:$0xff]
    %v37 = vld [vmem:[%s2 + $0x38] sm:$0xff]
    %v38 = vld [vmem:[%s4] sm:$0xff]
    %v39 = vld [vmem:[%s4 + $0x8] sm:$0xff]
    %v40 = vld [vmem:[%s4 + $0x10] sm:$0xff]
    %v41 = vld [vmem:[%s4 + $0x18] sm:$0xff]
    %v42 = vld [vmem:[%s4 + $0x20] sm:$0xff]
    %v43 = vld [vmem:[%s4 + $0x28] sm:$0xff]
    %v44 = vld [vmem:[%s4 + $0x30] sm:$0xff]
    %v45 = vld [vmem:[%s4 + $0x38] sm:$0xff]
    %vm46 = vcmask 64512
    %v48 = vsel %vm46, %v30, 0
    %v51 = vsel %vm46, %v31, 0
    %v54 = vsel %vm46, %v32, 0
    %v57 = vsel %vm46, %v33, 0
    %v60 = vsel %vm46, %v34, 0
    %v63 = vsel %vm46, %v35, 0
    %v66 = vsel %vm46, %v36, 0
    %v69 = vsel %vm46, %v37, 0
    %71 = vmatprep.subr.mxu0 0.0
    %72 = vmatpush1.msra.mxu0 0.0
    %73 = vmatprep.subr.mxu0 0.0
    %74 = vmatpush1.msra.mxu0 0.0
    %75 = vmatprep.subr.mxu0 0.0
    %76 = vmatpush1.msra.mxu0 0.0
    %77 = vmatprep.subr.mxu0 0.0
    %78 = vmatpush1.msra.mxu0 0.0
    %79 = vmatprep.subr.mxu0 0.0
    %80 = vmatpush1.msra.mxu0 0.0
    %81 = vmatprep.subr.mxu0 0.0
    %82 = vmatpush1.msra.mxu0 0.0
    %83 = vmatprep.subr.mxu0 0.0
    %84 = vmatpush1.msra.mxu0 0.0
    %85 = vmatprep.subr.mxu0 0.0
    %86 = vmatpush1.msra.mxu0 0.0
    %87 = vmatprep.subr.mxu0 0.0
    %88 = vmatpush1.msra.mxu0 0.0
    %89 = vmatprep.subr.mxu0 0.0
    %90 = vmatpush1.msra.mxu0 0.0
    %91 = vmatprep.subr.mxu0 0.0
    %92 = vmatpush1.msra.mxu0 0.0
    %93 = vmatprep.subr.mxu0 0.0
    %94 = vmatpush1.msra.mxu0 0.0
    %95 = vmatprep.subr.mxu0 0.0
    %96 = vmatpush1.msra.mxu0 0.0
    %97 = vmatprep.subr.mxu0 0.0
    %98 = vmatpush1.msra.mxu0 0.0
    %99 = vmatprep.subr.mxu0 0.0
    %100 = vmatpush1.msra.mxu0 0.0
    %101 = vmatprep.subr.mxu0 0.0
    %102 = vmatpush1.msra.mxu0 %v28
    %103 = vmatprep.subr.mxu0 0.0
    %104 = vmatpush2.msra.mxu0 0.0
    %105 = vmatprep.subr.mxu0 0.0
    %106 = vmatpush2.msra.mxu0 0.0
    %107 = vmatprep.subr.mxu0 0.0
    %108 = vmatpush2.msra.mxu0 0.0
    %109 = vmatprep.subr.mxu0 0.0
    %110 = vmatpush2.msra.mxu0 0.0
    %111 = vmatprep.subr.mxu0 0.0
    %112 = vmatpush2.msra.mxu0 0.0
    %113 = vmatprep.subr.mxu0 0.0
    %114 = vmatpush2.msra.mxu0 0.0
    %115 = vmatprep.subr.mxu0 0.0
    %116 = vmatpush2.msra.mxu0 0.0
    %117 = vmatprep.subr.mxu0 0.0
    %118 = vmatpush2.msra.mxu0 0.0
    %119 = vmatprep.subr.mxu0 0.0
    %120 = vmatpush2.msra.mxu0 0.0
    %121 = vmatprep.subr.mxu0 0.0
    %122 = vmatpush2.msra.mxu0 0.0
    %123 = vmatprep.subr.mxu0 0.0
    %124 = vmatpush2.msra.mxu0 0.0
    %125 = vmatprep.subr.mxu0 0.0
    %126 = vmatpush2.msra.mxu0 0.0
    %127 = vmatprep.subr.mxu0 0.0
    %128 = vmatpush2.msra.mxu0 0.0
    %129 = vmatprep.subr.mxu0 0.0
    %130 = vmatpush2.msra.mxu0 0.0
    %131 = vmatprep.subr.mxu0 0.0
    %132 = vmatpush2.msra.mxu0 0.0
    %133 = vmatprep.subr.mxu0 0.0
    %134 = vmatpush2.msra.mxu0 0.0
    %135 = vmatprep.mubr.f32.mxu0 0.0
    %136 = vmatmul.mubr.f32.gmra.mxu0 %v48
    %v137 = vpop.f32.mrf.mxu0
    %v138 = vadd.f32 0.0, %v137
    %v139 = vpop.f32.mrf.mxu0
    %140 = vmatprep.mubr.f32.mxu0 0.0
    %141 = vmatmul.mubr.f32.gmra.mxu0 %v51
    %v142 = vpop.f32.mrf.mxu0
    %v143 = vadd.f32 0.0, %v142
    %v144 = vpop.f32.mrf.mxu0
    %145 = vmatprep.mubr.f32.mxu0 0.0
    %146 = vmatmul.mubr.f32.gmra.mxu0 %v54
    %v147 = vpop.f32.mrf.mxu0
    %v148 = vadd.f32 0.0, %v147
    %v149 = vpop.f32.mrf.mxu0
    %150 = vmatprep.mubr.f32.mxu0 0.0
    %151 = vmatmul.mubr.f32.gmra.mxu0 %v57
    %v152 = vpop.f32.mrf.mxu0
    %v153 = vadd.f32 0.0, %v152
    %v154 = vpop.f32.mrf.mxu0
    %155 = vmatprep.mubr.f32.mxu0 0.0
    %156 = vmatmul.mubr.f32.gmra.mxu0 %v60
    %v157 = vpop.f32.mrf.mxu0
    %v158 = vadd.f32 0.0, %v157
    %v159 = vpop.f32.mrf.mxu0
    %160 = vmatprep.mubr.f32.mxu0 0.0
    %161 = vmatmul.mubr.f32.gmra.mxu0 %v63
    %v162 = vpop.f32.mrf.mxu0
    %v163 = vadd.f32 0.0, %v162
    %v164 = vpop.f32.mrf.mxu0
    %165 = vmatprep.mubr.f32.mxu0 0.0
    %166 = vmatmul.mubr.f32.gmra.mxu0 %v66
    %v167 = vpop.f32.mrf.mxu0
    %v168 = vadd.f32 0.0, %v167
    %v169 = vpop.f32.mrf.mxu0
    %170 = vmatprep.mubr.f32.mxu0 0.0
    %171 = vmatmul.mubr.f32.gmra.mxu0 %v69
    %v172 = vpop.f32.mrf.mxu0
    %v173 = vadd.f32 0.0, %v172
    %v174 = vpop.f32.mrf.mxu0
    %175 = vdwg.mxu0
    %177 = vset.pattern.permute.xlu0 0
    %178 = vperm.xlu0 %177, %v38
    %v179 = vpop.permute.xlu0 %178
    %182 = vset.pattern.permute.xlu0 0
    %183 = vperm.xlu0 %182, %v39
    %v184 = vpop.permute.xlu0 %183
    %187 = vset.pattern.permute.xlu0 0
    %188 = vperm.xlu0 %187, %v40
    %v189 = vpop.permute.xlu0 %188
    %192 = vset.pattern.permute.xlu0 0
    %193 = vperm.xlu0 %192, %v41
    %v194 = vpop.permute.xlu0 %193
    %197 = vset.pattern.permute.xlu0 0
    %198 = vperm.xlu0 %197, %v42
    %v199 = vpop.permute.xlu0 %198
    %202 = vset.pattern.permute.xlu0 0
    %203 = vperm.xlu0 %202, %v43
    %v204 = vpop.permute.xlu0 %203
    %207 = vset.pattern.permute.xlu0 0
    %208 = vperm.xlu0 %207, %v44
    %v209 = vpop.permute.xlu0 %208
    %212 = vset.pattern.permute.xlu0 0
    %213 = vperm.xlu0 %212, %v45
    %v214 = vpop.permute.xlu0 %213
    %vm216 = vcmask 130048
    %v218 = vsel %vm216, %v138, 0
    %v221 = vsel %vm216, %v143, 0
    %v224 = vsel %vm216, %v148, 0
    %v227 = vsel %vm216, %v153, 0
    %v230 = vsel %vm216, %v158, 0
    %v233 = vsel %vm216, %v163, 0
    %v236 = vsel %vm216, %v168, 0
    %v239 = vsel %vm216, %v173, 0
    %241 = vmatprep.subr.mxu0 0.0
    %242 = vmatpush1.msra.mxu0 0.0
    %243 = vmatprep.subr.mxu0 0.0
    %244 = vmatpush1.msra.mxu0 0.0
    %245 = vmatprep.subr.mxu0 0.0
    %246 = vmatpush1.msra.mxu0 0.0
    %247 = vmatprep.subr.mxu0 0.0
    %248 = vmatpush1.msra.mxu0 0.0
    %249 = vmatprep.subr.mxu0 0.0
    %250 = vmatpush1.msra.mxu0 0.0
    %251 = vmatprep.subr.mxu0 0.0
    %252 = vmatpush1.msra.mxu0 0.0
    %253 = vmatprep.subr.mxu0 0.0
    %254 = vmatpush1.msra.mxu0 0.0
    %255 = vmatprep.subr.mxu0 0.0
    %256 = vmatpush1.msra.mxu0 0.0
    %257 = vmatprep.subr.mxu0 0.0
    %258 = vmatpush1.msra.mxu0 0.0
    %259 = vmatprep.subr.mxu0 0.0
    %260 = vmatpush1.msra.mxu0 0.0
    %261 = vmatprep.subr.mxu0 0.0
    %262 = vmatpush1.msra.mxu0 0.0
    %263 = vmatprep.subr.mxu0 0.0
    %264 = vmatpush1.msra.mxu0 0.0
    %265 = vmatprep.subr.mxu0 0.0
    %266 = vmatpush1.msra.mxu0 0.0
    %267 = vmatprep.subr.mxu0 0.0
    %268 = vmatpush1.msra.mxu0 0.0
    %269 = vmatprep.subr.mxu0 0.0
    %270 = vmatpush1.msra.mxu0 %v27
    %271 = vmatprep.subr.mxu0 0.0
    %272 = vmatpush1.msra.mxu0 %v26
    %273 = vmatprep.subr.mxu0 0.0
    %274 = vmatpush2.msra.mxu0 0.0
    %275 = vmatprep.subr.mxu0 0.0
    %276 = vmatpush2.msra.mxu0 0.0
    %277 = vmatprep.subr.mxu0 0.0
    %278 = vmatpush2.msra.mxu0 0.0
    %279 = vmatprep.subr.mxu0 0.0
    %280 = vmatpush2.msra.mxu0 0.0
    %281 = vmatprep.subr.mxu0 0.0
    %282 = vmatpush2.msra.mxu0 0.0
    %283 = vmatprep.subr.mxu0 0.0
    %284 = vmatpush2.msra.mxu0 0.0
    %285 = vmatprep.subr.mxu0 0.0
    %286 = vmatpush2.msra.mxu0 0.0
    %287 = vmatprep.subr.mxu0 0.0
    %288 = vmatpush2.msra.mxu0 0.0
    %289 = vmatprep.subr.mxu0 0.0
    %290 = vmatpush2.msra.mxu0 0.0
    %291 = vmatprep.subr.mxu0 0.0
    %292 = vmatpush2.msra.mxu0 0.0
    %293 = vmatprep.subr.mxu0 0.0
    %294 = vmatpush2.msra.mxu0 0.0
    %295 = vmatprep.subr.mxu0 0.0
    %296 = vmatpush2.msra.mxu0 0.0
    %297 = vmatprep.subr.mxu0 0.0
    %298 = vmatpush2.msra.mxu0 0.0
    %299 = vmatprep.subr.mxu0 0.0
    %300 = vmatpush2.msra.mxu0 0.0
    %301 = vmatprep.subr.mxu0 0.0
    %302 = vmatpush2.msra.mxu0 0.0
    %303 = vmatprep.subr.mxu0 0.0
    %304 = vmatpush2.msra.mxu0 0.0
    %305 = vmatprep.mubr.f32.mxu0 0.0
    %306 = vmatmul.mubr.f32.gmra.mxu0 %v218
    %v307 = vpop.f32.mrf.mxu0
    %v308 = vadd.f32 %v179, %v307
    %v309 = vpop.f32.mrf.mxu0
    %310 = vmatprep.mubr.f32.mxu0 0.0
    %311 = vmatmul.mubr.f32.gmra.mxu0 %v221
    %v312 = vpop.f32.mrf.mxu0
    %v313 = vadd.f32 %v184, %v312
    %v314 = vpop.f32.mrf.mxu0
    %315 = vmatprep.mubr.f32.mxu0 0.0
    %316 = vmatmul.mubr.f32.gmra.mxu0 %v224
    %v317 = vpop.f32.mrf.mxu0
    %v318 = vadd.f32 %v189, %v317
    %v319 = vpop.f32.mrf.mxu0
    %320 = vmatprep.mubr.f32.mxu0 0.0
    %321 = vmatmul.mubr.f32.gmra.mxu0 %v227
    %v322 = vpop.f32.mrf.mxu0
    %v323 = vadd.f32 %v194, %v322
    %v324 = vpop.f32.mrf.mxu0
    %325 = vmatprep.mubr.f32.mxu0 0.0
    %326 = vmatmul.mubr.f32.gmra.mxu0 %v230
    %v327 = vpop.f32.mrf.mxu0
    %v328 = vadd.f32 %v199, %v327
    %v329 = vpop.f32.mrf.mxu0
    %330 = vmatprep.mubr.f32.mxu0 0.0
    %331 = vmatmul.mubr.f32.gmra.mxu0 %v233
    %v332 = vpop.f32.mrf.mxu0
    %v333 = vadd.f32 %v204, %v332
    %v334 = vpop.f32.mrf.mxu0
    %335 = vmatprep.mubr.f32.mxu0 0.0
    %336 = vmatmul.mubr.f32.gmra.mxu0 %v236
    %v337 = vpop.f32.mrf.mxu0
    %v338 = vadd.f32 %v209, %v337
    %v339 = vpop.f32.mrf.mxu0
    %340 = vmatprep.mubr.f32.mxu0 0.0
    %341 = vmatmul.mubr.f32.gmra.mxu0 %v239
    %v342 = vpop.f32.mrf.mxu0
    %v343 = vadd.f32 %v214, %v342
    %v344 = vpop.f32.mrf.mxu0
    %345 = vdwg.mxu0
    %v346 = vmax.f32 %v308, 0.0
    %v347 = vmax.f32 %v313, 0.0
    %v348 = vmax.f32 %v318, 0.0
    %v349 = vmax.f32 %v323, 0.0
    %v350 = vmax.f32 %v328, 0.0
    %v351 = vmax.f32 %v333, 0.0
    %v352 = vmax.f32 %v338, 0.0
    %v353 = vmax.f32 %v343, 0.0
    %v354 = vld [vmem:[%s3] sm:$0xff]
    %v355 = vld [vmem:[%s3 + $0x8] sm:$0xff]
    %v356 = vld [vmem:[%s5] sm:$0xff]
    %v357 = vld [vmem:[%s5 + $0x8] sm:$0xff]
    %vm358 = vcmask 523264
    %v360 = vsel %vm358, %v354, 0
    %v363 = vsel %vm358, %v355, 0
    %365 = vmatprep.subr.mxu0 0.0
    %366 = vmatpush1.msra.mxu0 0.0
    %367 = vmatprep.subr.mxu0 0.0
    %368 = vmatpush1.msra.mxu0 0.0
    %369 = vmatprep.subr.mxu0 0.0
    %370 = vmatpush1.msra.mxu0 0.0
    %371 = vmatprep.subr.mxu0 0.0
    %372 = vmatpush1.msra.mxu0 0.0
    %373 = vmatprep.subr.mxu0 0.0
    %374 = vmatpush1.msra.mxu0 0.0
    %375 = vmatprep.subr.mxu0 0.0
    %376 = vmatpush1.msra.mxu0 0.0
    %377 = vmatprep.subr.mxu0 0.0
    %378 = vmatpush1.msra.mxu0 0.0
    %379 = vmatprep.subr.mxu0 0.0
    %380 = vmatpush1.msra.mxu0 0.0
    %381 = vmatprep.subr.mxu0 0.0
    %382 = vmatpush1.msra.mxu0 %v353
    %383 = vmatprep.subr.mxu0 0.0
    %384 = vmatpush1.msra.mxu0 %v352
    %385 = vmatprep.subr.mxu0 0.0
    %386 = vmatpush1.msra.mxu0 %v351
    %387 = vmatprep.subr.mxu0 0.0
    %388 = vmatpush1.msra.mxu0 %v350
    %389 = vmatprep.subr.mxu0 0.0
    %390 = vmatpush1.msra.mxu0 %v349
    %391 = vmatprep.subr.mxu0 0.0
    %392 = vmatpush1.msra.mxu0 %v348
    %393 = vmatprep.subr.mxu0 0.0
    %394 = vmatpush1.msra.mxu0 %v347
    %395 = vmatprep.subr.mxu0 0.0
    %396 = vmatpush1.msra.mxu0 %v346
    %397 = vmatprep.subr.mxu0 0.0
    %398 = vmatpush2.msra.mxu0 0.0
    %399 = vmatprep.subr.mxu0 0.0
    %400 = vmatpush2.msra.mxu0 0.0
    %401 = vmatprep.subr.mxu0 0.0
    %402 = vmatpush2.msra.mxu0 0.0
    %403 = vmatprep.subr.mxu0 0.0
    %404 = vmatpush2.msra.mxu0 0.0
    %405 = vmatprep.subr.mxu0 0.0
    %406 = vmatpush2.msra.mxu0 0.0
    %407 = vmatprep.subr.mxu0 0.0
    %408 = vmatpush2.msra.mxu0 0.0
    %409 = vmatprep.subr.mxu0 0.0
    %410 = vmatpush2.msra.mxu0 0.0
    %411 = vmatprep.subr.mxu0 0.0
    %412 = vmatpush2.msra.mxu0 0.0
    %413 = vmatprep.subr.mxu0 0.0
    %414 = vmatpush2.msra.mxu0 0.0
    %415 = vmatprep.subr.mxu0 0.0
    %416 = vmatpush2.msra.mxu0 0.0
    %417 = vmatprep.subr.mxu0 0.0
    %418 = vmatpush2.msra.mxu0 0.0
    %419 = vmatprep.subr.mxu0 0.0
    %420 = vmatpush2.msra.mxu0 0.0
    %421 = vmatprep.subr.mxu0 0.0
    %422 = vmatpush2.msra.mxu0 0.0
    %423 = vmatprep.subr.mxu0 0.0
    %424 = vmatpush2.msra.mxu0 0.0
    %425 = vmatprep.subr.mxu0 0.0
    %426 = vmatpush2.msra.mxu0 0.0
    %427 = vmatprep.subr.mxu0 0.0
    %428 = vmatpush2.msra.mxu0 0.0
    %429 = vmatprep.mubr.f32.mxu0 0.0
    %430 = vmatmul.mubr.f32.gmra.mxu0 %v360
    %v431 = vpop.f32.mrf.mxu0
    %v432 = vadd.f32 0.0, %v431
    %v433 = vpop.f32.mrf.mxu0
    %434 = vmatprep.mubr.f32.mxu0 0.0
    %435 = vmatmul.mubr.f32.gmra.mxu0 %v363
    %v436 = vpop.f32.mrf.mxu0
    %v437 = vadd.f32 0.0, %v436
    %v438 = vpop.f32.mrf.mxu0
    %439 = vdwg.mxu0
    %441 = vset.pattern.permute.xlu0 0
    %442 = vperm.xlu0 %441, %v356
    %v443 = vpop.permute.xlu0 %442
    %446 = vset.pattern.permute.xlu0 0
    %447 = vperm.xlu0 %446, %v357
    %v448 = vpop.permute.xlu0 %447
    %v451 = vsel %vm216, %v432, 0
    %v454 = vsel %vm216, %v437, 0
    %456 = vmatprep.subr.mxu0 0.0
    %457 = vmatpush1.msra.mxu0 0.0
    %458 = vmatprep.subr.mxu0 0.0
    %459 = vmatpush1.msra.mxu0 0.0
    %460 = vmatprep.subr.mxu0 0.0
    %461 = vmatpush1.msra.mxu0 0.0
    %462 = vmatprep.subr.mxu0 0.0
    %463 = vmatpush1.msra.mxu0 0.0
    %464 = vmatprep.subr.mxu0 0.0
    %465 = vmatpush1.msra.mxu0 0.0
    %466 = vmatprep.subr.mxu0 0.0
    %467 = vmatpush1.msra.mxu0 0.0
    %468 = vmatprep.subr.mxu0 0.0
    %469 = vmatpush1.msra.mxu0 0.0
    %470 = vmatprep.subr.mxu0 0.0
    %471 = vmatpush1.msra.mxu0 0.0
    %472 = vmatprep.subr.mxu0 0.0
    %473 = vmatpush1.msra.mxu0 0.0
    %474 = vmatprep.subr.mxu0 0.0
    %475 = vmatpush1.msra.mxu0 0.0
    %476 = vmatprep.subr.mxu0 0.0
    %477 = vmatpush1.msra.mxu0 0.0
    %478 = vmatprep.subr.mxu0 0.0
    %479 = vmatpush1.msra.mxu0 0.0
    %480 = vmatprep.subr.mxu0 0.0
    %481 = vmatpush1.msra.mxu0 0.0
    %482 = vmatprep.subr.mxu0 0.0
    %483 = vmatpush1.msra.mxu0 0.0
    %484 = vmatprep.subr.mxu0 0.0
    %485 = vmatpush1.msra.mxu0 %v27
    %486 = vmatprep.subr.mxu0 0.0
    %487 = vmatpush1.msra.mxu0 %v26
    %488 = vmatprep.subr.mxu0 0.0
    %489 = vmatpush2.msra.mxu0 0.0
    %490 = vmatprep.subr.mxu0 0.0
    %491 = vmatpush2.msra.mxu0 0.0
    %492 = vmatprep.subr.mxu0 0.0
    %493 = vmatpush2.msra.mxu0 0.0
    %494 = vmatprep.subr.mxu0 0.0
    %495 = vmatpush2.msra.mxu0 0.0
    %496 = vmatprep.subr.mxu0 0.0
    %497 = vmatpush2.msra.mxu0 0.0
    %498 = vmatprep.subr.mxu0 0.0
    %499 = vmatpush2.msra.mxu0 0.0
    %500 = vmatprep.subr.mxu0 0.0
    %501 = vmatpush2.msra.mxu0 0.0
    %502 = vmatprep.subr.mxu0 0.0
    %503 = vmatpush2.msra.mxu0 0.0
    %504 = vmatprep.subr.mxu0 0.0
    %505 = vmatpush2.msra.mxu0 0.0
    %506 = vmatprep.subr.mxu0 0.0
    %507 = vmatpush2.msra.mxu0 0.0
    %508 = vmatprep.subr.mxu0 0.0
    %509 = vmatpush2.msra.mxu0 0.0
    %510 = vmatprep.subr.mxu0 0.0
    %511 = vmatpush2.msra.mxu0 0.0
    %512 = vmatprep.subr.mxu0 0.0
    %513 = vmatpush2.msra.mxu0 0.0
    %514 = vmatprep.subr.mxu0 0.0
    %515 = vmatpush2.msra.mxu0 0.0
    %516 = vmatprep.subr.mxu0 0.0
    %517 = vmatpush2.msra.mxu0 0.0
    %518 = vmatprep.subr.mxu0 0.0
    %519 = vmatpush2.msra.mxu0 0.0
    %520 = vmatprep.mubr.f32.mxu0 0.0
    %521 = vmatmul.mubr.f32.gmra.mxu0 %v451
    %v522 = vpop.f32.mrf.mxu0
    %v523 = vadd.f32 %v443, %v522
    %v524 = vpop.f32.mrf.mxu0
    %525 = vmatprep.mubr.f32.mxu0 0.0
    %526 = vmatmul.mubr.f32.gmra.mxu0 %v454
    %v527 = vpop.f32.mrf.mxu0
    %v528 = vadd.f32 %v448, %v527
    %v529 = vpop.f32.mrf.mxu0
    %530 = vdwg.mxu0
    %v531 = vxor.u32 %v523, 2147483648
    %v532 = vmul.f32 %v531, 1.442695
    %v533 = vpow.pop %v532
    %v534 = vadd.f32 %v533, 1.0
    %v535 = vrcp.pop %v534
    %v536 = vmul.f32 1.0, %v535
    %v537 = vxor.u32 %v528, 2147483648
    %v538 = vmul.f32 %v537, 1.442695
    %v539 = vpow.pop %v538
    %v540 = vadd.f32 %v539, 1.0
    %v541 = vrcp.pop %v540
    %v542 = vmul.f32 1.0, %v541
    %v543 = vadd.f32 %v536, 0.0
    %v544 = vmul.f32 %v536, 1.442695
    %v545 = vpow.pop %v544
    %v546 = vmul.f32 %v29, %v545
    %v547 = vadd.f32 %v546, %v542
    %s548 = scalar_lea.vmem %s2, 64
    %v549 = vld [vmem:[%s548] sm:$0xff]
    %v550 = vld [vmem:[%s548 + $0x8] sm:$0xff]
    %v551 = vld [vmem:[%s548 + $0x10] sm:$0xff]
    %v552 = vld [vmem:[%s548 + $0x18] sm:$0xff]
    %v553 = vld [vmem:[%s548 + $0x20] sm:$0xff]
    %v554 = vld [vmem:[%s548 + $0x28] sm:$0xff]
    %v555 = vld [vmem:[%s548 + $0x30] sm:$0xff]
    %v556 = vld [vmem:[%s548 + $0x38] sm:$0xff]
    %s557 = scalar_lea.vmem %s4, 64
    %v558 = vld [vmem:[%s557] sm:$0xff]
    %v559 = vld [vmem:[%s557 + $0x8] sm:$0xff]
    %v560 = vld [vmem:[%s557 + $0x10] sm:$0xff]
    %v561 = vld [vmem:[%s557 + $0x18] sm:$0xff]
    %v562 = vld [vmem:[%s557 + $0x20] sm:$0xff]
    %v563 = vld [vmem:[%s557 + $0x28] sm:$0xff]
    %v564 = vld [vmem:[%s557 + $0x30] sm:$0xff]
    %v565 = vld [vmem:[%s557 + $0x38] sm:$0xff]
    %v567 = vsel %vm46, %v549, 0
    %v570 = vsel %vm46, %v550, 0
    %v573 = vsel %vm46, %v551, 0
    %v576 = vsel %vm46, %v552, 0
    %v579 = vsel %vm46, %v553, 0
    %v582 = vsel %vm46, %v554, 0
    %v585 = vsel %vm46, %v555, 0
    %v588 = vsel %vm46, %v556, 0
    %590 = vmatprep.subr.mxu0 0.0
    %591 = vmatpush1.msra.mxu0 0.0
    %592 = vmatprep.subr.mxu0 0.0
    %593 = vmatpush1.msra.mxu0 0.0
    %594 = vmatprep.subr.mxu0 0.0
    %595 = vmatpush1.msra.mxu0 0.0
    %596 = vmatprep.subr.mxu0 0.0
    %597 = vmatpush1.msra.mxu0 0.0
    %598 = vmatprep.subr.mxu0 0.0
    %599 = vmatpush1.msra.mxu0 0.0
    %600 = vmatprep.subr.mxu0 0.0
    %601 = vmatpush1.msra.mxu0 0.0
    %602 = vmatprep.subr.mxu0 0.0
    %603 = vmatpush1.msra.mxu0 0.0
    %604 = vmatprep.subr.mxu0 0.0
    %605 = vmatpush1.msra.mxu0 0.0
    %606 = vmatprep.subr.mxu0 0.0
    %607 = vmatpush1.msra.mxu0 0.0
    %608 = vmatprep.subr.mxu0 0.0
    %609 = vmatpush1.msra.mxu0 0.0
    %610 = vmatprep.subr.mxu0 0.0
    %611 = vmatpush1.msra.mxu0 0.0
    %612 = vmatprep.subr.mxu0 0.0
    %613 = vmatpush1.msra.mxu0 0.0
    %614 = vmatprep.subr.mxu0 0.0
    %615 = vmatpush1.msra.mxu0 0.0
    %616 = vmatprep.subr.mxu0 0.0
    %617 = vmatpush1.msra.mxu0 0.0
    %618 = vmatprep.subr.mxu0 0.0
    %619 = vmatpush1.msra.mxu0 0.0
    %620 = vmatprep.subr.mxu0 0.0
    %621 = vmatpush1.msra.mxu0 %v547
    %622 = vmatprep.subr.mxu0 0.0
    %623 = vmatpush2.msra.mxu0 0.0
    %624 = vmatprep.subr.mxu0 0.0
    %625 = vmatpush2.msra.mxu0 0.0
    %626 = vmatprep.subr.mxu0 0.0
    %627 = vmatpush2.msra.mxu0 0.0
    %628 = vmatprep.subr.mxu0 0.0
    %629 = vmatpush2.msra.mxu0 0.0
    %630 = vmatprep.subr.mxu0 0.0
    %631 = vmatpush2.msra.mxu0 0.0
    %632 = vmatprep.subr.mxu0 0.0
    %633 = vmatpush2.msra.mxu0 0.0
    %634 = vmatprep.subr.mxu0 0.0
    %635 = vmatpush2.msra.mxu0 0.0
    %636 = vmatprep.subr.mxu0 0.0
    %637 = vmatpush2.msra.mxu0 0.0
    %638 = vmatprep.subr.mxu0 0.0
    %639 = vmatpush2.msra.mxu0 0.0
    %640 = vmatprep.subr.mxu0 0.0
    %641 = vmatpush2.msra.mxu0 0.0
    %642 = vmatprep.subr.mxu0 0.0
    %643 = vmatpush2.msra.mxu0 0.0
    %644 = vmatprep.subr.mxu0 0.0
    %645 = vmatpush2.msra.mxu0 0.0
    %646 = vmatprep.subr.mxu0 0.0
    %647 = vmatpush2.msra.mxu0 0.0
    %648 = vmatprep.subr.mxu0 0.0
    %649 = vmatpush2.msra.mxu0 0.0
    %650 = vmatprep.subr.mxu0 0.0
    %651 = vmatpush2.msra.mxu0 0.0
    %652 = vmatprep.subr.mxu0 0.0
    %653 = vmatpush2.msra.mxu0 0.0
    %654 = vmatprep.mubr.f32.mxu0 0.0
    %655 = vmatmul.mubr.f32.gmra.mxu0 %v567
    %v656 = vpop.f32.mrf.mxu0
    %v657 = vadd.f32 0.0, %v656
    %v658 = vpop.f32.mrf.mxu0
    %659 = vmatprep.mubr.f32.mxu0 0.0
    %660 = vmatmul.mubr.f32.gmra.mxu0 %v570
    %v661 = vpop.f32.mrf.mxu0
    %v662 = vadd.f32 0.0, %v661
    %v663 = vpop.f32.mrf.mxu0
    %664 = vmatprep.mubr.f32.mxu0 0.0
    %665 = vmatmul.mubr.f32.gmra.mxu0 %v573
    %v666 = vpop.f32.mrf.mxu0
    %v667 = vadd.f32 0.0, %v666
    %v668 = vpop.f32.mrf.mxu0
    %669 = vmatprep.mubr.f32.mxu0 0.0
    %670 = vmatmul.mubr.f32.gmra.mxu0 %v576
    %v671 = vpop.f32.mrf.mxu0
    %v672 = vadd.f32 0.0, %v671
    %v673 = vpop.f32.mrf.mxu0
    %674 = vmatprep.mubr.f32.mxu0 0.0
    %675 = vmatmul.mubr.f32.gmra.mxu0 %v579
    %v676 = vpop.f32.mrf.mxu0
    %v677 = vadd.f32 0.0, %v676
    %v678 = vpop.f32.mrf.mxu0
    %679 = vmatprep.mubr.f32.mxu0 0.0
    %680 = vmatmul.mubr.f32.gmra.mxu0 %v582
    %v681 = vpop.f32.mrf.mxu0
    %v682 = vadd.f32 0.0, %v681
    %v683 = vpop.f32.mrf.mxu0
    %684 = vmatprep.mubr.f32.mxu0 0.0
    %685 = vmatmul.mubr.f32.gmra.mxu0 %v585
    %v686 = vpop.f32.mrf.mxu0
    %v687 = vadd.f32 0.0, %v686
    %v688 = vpop.f32.mrf.mxu0
    %689 = vmatprep.mubr.f32.mxu0 0.0
    %690 = vmatmul.mubr.f32.gmra.mxu0 %v588
    %v691 = vpop.f32.mrf.mxu0
    %v692 = vadd.f32 0.0, %v691
    %v693 = vpop.f32.mrf.mxu0
    %694 = vdwg.mxu0
    %696 = vset.pattern.permute.xlu0 0
    %697 = vperm.xlu0 %696, %v558
    %v698 = vpop.permute.xlu0 %697
    %701 = vset.pattern.permute.xlu0 0
    %702 = vperm.xlu0 %701, %v559
    %v703 = vpop.permute.xlu0 %702
    %706 = vset.pattern.permute.xlu0 0
    %707 = vperm.xlu0 %706, %v560
    %v708 = vpop.permute.xlu0 %707
    %711 = vset.pattern.permute.xlu0 0
    %712 = vperm.xlu0 %711, %v561
    %v713 = vpop.permute.xlu0 %712
    %716 = vset.pattern.permute.xlu0 0
    %717 = vperm.xlu0 %716, %v562
    %v718 = vpop.permute.xlu0 %717
    %721 = vset.pattern.permute.xlu0 0
    %722 = vperm.xlu0 %721, %v563
    %v723 = vpop.permute.xlu0 %722
    %726 = vset.pattern.permute.xlu0 0
    %727 = vperm.xlu0 %726, %v564
    %v728 = vpop.permute.xlu0 %727
    %731 = vset.pattern.permute.xlu0 0
    %732 = vperm.xlu0 %731, %v565
    %v733 = vpop.permute.xlu0 %732
    %v736 = vsel %vm216, %v657, 0
    %v739 = vsel %vm216, %v662, 0
    %v742 = vsel %vm216, %v667, 0
    %v745 = vsel %vm216, %v672, 0
    %v748 = vsel %vm216, %v677, 0
    %v751 = vsel %vm216, %v682, 0
    %v754 = vsel %vm216, %v687, 0
    %v757 = vsel %vm216, %v692, 0
    %759 = vmatprep.subr.mxu0 0.0
    %760 = vmatpush1.msra.mxu0 0.0
    %761 = vmatprep.subr.mxu0 0.0
    %762 = vmatpush1.msra.mxu0 0.0
    %763 = vmatprep.subr.mxu0 0.0
    %764 = vmatpush1.msra.mxu0 0.0
    %765 = vmatprep.subr.mxu0 0.0
    %766 = vmatpush1.msra.mxu0 0.0
    %767 = vmatprep.subr.mxu0 0.0
    %768 = vmatpush1.msra.mxu0 0.0
    %769 = vmatprep.subr.mxu0 0.0
    %770 = vmatpush1.msra.mxu0 0.0
    %771 = vmatprep.subr.mxu0 0.0
    %772 = vmatpush1.msra.mxu0 0.0
    %773 = vmatprep.subr.mxu0 0.0
    %774 = vmatpush1.msra.mxu0 0.0
    %775 = vmatprep.subr.mxu0 0.0
    %776 = vmatpush1.msra.mxu0 0.0
    %777 = vmatprep.subr.mxu0 0.0
    %778 = vmatpush1.msra.mxu0 0.0
    %779 = vmatprep.subr.mxu0 0.0
    %780 = vmatpush1.msra.mxu0 0.0
    %781 = vmatprep.subr.mxu0 0.0
    %782 = vmatpush1.msra.mxu0 0.0
    %783 = vmatprep.subr.mxu0 0.0
    %784 = vmatpush1.msra.mxu0 0.0
    %785 = vmatprep.subr.mxu0 0.0
    %786 = vmatpush1.msra.mxu0 0.0
    %787 = vmatprep.subr.mxu0 0.0
    %788 = vmatpush1.msra.mxu0 %v27
    %789 = vmatprep.subr.mxu0 0.0
    %790 = vmatpush1.msra.mxu0 %v26
    %791 = vmatprep.subr.mxu0 0.0
    %792 = vmatpush2.msra.mxu0 0.0
    %793 = vmatprep.subr.mxu0 0.0
    %794 = vmatpush2.msra.mxu0 0.0
    %795 = vmatprep.subr.mxu0 0.0
    %796 = vmatpush2.msra.mxu0 0.0
    %797 = vmatprep.subr.mxu0 0.0
    %798 = vmatpush2.msra.mxu0 0.0
    %799 = vmatprep.subr.mxu0 0.0
    %800 = vmatpush2.msra.mxu0 0.0
    %801 = vmatprep.subr.mxu0 0.0
    %802 = vmatpush2.msra.mxu0 0.0
    %803 = vmatprep.subr.mxu0 0.0
    %804 = vmatpush2.msra.mxu0 0.0
    %805 = vmatprep.subr.mxu0 0.0
    %806 = vmatpush2.msra.mxu0 0.0
    %807 = vmatprep.subr.mxu0 0.0
    %808 = vmatpush2.msra.mxu0 0.0
    %809 = vmatprep.subr.mxu0 0.0
    %810 = vmatpush2.msra.mxu0 0.0
    %811 = vmatprep.subr.mxu0 0.0
    %812 = vmatpush2.msra.mxu0 0.0
    %813 = vmatprep.subr.mxu0 0.0
    %814 = vmatpush2.msra.mxu0 0.0
    %815 = vmatprep.subr.mxu0 0.0
    %816 = vmatpush2.msra.mxu0 0.0
    %817 = vmatprep.subr.mxu0 0.0
    %818 = vmatpush2.msra.mxu0 0.0
    %819 = vmatprep.subr.mxu0 0.0
    %820 = vmatpush2.msra.mxu0 0.0
    %821 = vmatprep.subr.mxu0 0.0
    %822 = vmatpush2.msra.mxu0 0.0
    %823 = vmatprep.mubr.f32.mxu0 0.0
    %824 = vmatmul.mubr.f32.gmra.mxu0 %v736
    %v825 = vpop.f32.mrf.mxu0
    %v826 = vadd.f32 %v698, %v825
    %v827 = vpop.f32.mrf.mxu0
    %828 = vmatprep.mubr.f32.mxu0 0.0
    %829 = vmatmul.mubr.f32.gmra.mxu0 %v739
    %v830 = vpop.f32.mrf.mxu0
    %v831 = vadd.f32 %v703, %v830
    %v832 = vpop.f32.mrf.mxu0
    %833 = vmatprep.mubr.f32.mxu0 0.0
    %834 = vmatmul.mubr.f32.gmra.mxu0 %v742
    %v835 = vpop.f32.mrf.mxu0
    %v836 = vadd.f32 %v708, %v835
    %v837 = vpop.f32.mrf.mxu0
    %838 = vmatprep.mubr.f32.mxu0 0.0
    %839 = vmatmul.mubr.f32.gmra.mxu0 %v745
    %v840 = vpop.f32.mrf.mxu0
    %v841 = vadd.f32 %v713, %v840
    %v842 = vpop.f32.mrf.mxu0
    %843 = vmatprep.mubr.f32.mxu0 0.0
    %844 = vmatmul.mubr.f32.gmra.mxu0 %v748
    %v845 = vpop.f32.mrf.mxu0
    %v846 = vadd.f32 %v718, %v845
    %v847 = vpop.f32.mrf.mxu0
    %848 = vmatprep.mubr.f32.mxu0 0.0
    %849 = vmatmul.mubr.f32.gmra.mxu0 %v751
    %v850 = vpop.f32.mrf.mxu0
    %v851 = vadd.f32 %v723, %v850
    %v852 = vpop.f32.mrf.mxu0
    %853 = vmatprep.mubr.f32.mxu0 0.0
    %854 = vmatmul.mubr.f32.gmra.mxu0 %v754
    %v855 = vpop.f32.mrf.mxu0
    %v856 = vadd.f32 %v728, %v855
    %v857 = vpop.f32.mrf.mxu0
    %858 = vmatprep.mubr.f32.mxu0 0.0
    %859 = vmatmul.mubr.f32.gmra.mxu0 %v757
    %v860 = vpop.f32.mrf.mxu0
    %v861 = vadd.f32 %v733, %v860
    %v862 = vpop.f32.mrf.mxu0
    %863 = vdwg.mxu0
    %v864 = vmax.f32 %v826, 0.0
    %v865 = vmax.f32 %v831, 0.0
    %v866 = vmax.f32 %v836, 0.0
    %v867 = vmax.f32 %v841, 0.0
    %v868 = vmax.f32 %v846, 0.0
    %v869 = vmax.f32 %v851, 0.0
    %v870 = vmax.f32 %v856, 0.0
    %v871 = vmax.f32 %v861, 0.0
    %s872 = scalar_lea.vmem %s3, 16
    %v873 = vld [vmem:[%s872] sm:$0xff]
    %v874 = vld [vmem:[%s872 + $0x8] sm:$0xff]
    %s875 = scalar_lea.vmem %s5, 16
    %v876 = vld [vmem:[%s875] sm:$0xff]
    %v877 = vld [vmem:[%s875 + $0x8] sm:$0xff]
    %v879 = vsel %vm358, %v873, 0
    %v882 = vsel %vm358, %v874, 0
    %884 = vmatprep.subr.mxu0 0.0
    %885 = vmatpush1.msra.mxu0 0.0
    %886 = vmatprep.subr.mxu0 0.0
    %887 = vmatpush1.msra.mxu0 0.0
    %888 = vmatprep.subr.mxu0 0.0
    %889 = vmatpush1.msra.mxu0 0.0
    %890 = vmatprep.subr.mxu0 0.0
    %891 = vmatpush1.msra.mxu0 0.0
    %892 = vmatprep.subr.mxu0 0.0
    %893 = vmatpush1.msra.mxu0 0.0
    %894 = vmatprep.subr.mxu0 0.0
    %895 = vmatpush1.msra.mxu0 0.0
    %896 = vmatprep.subr.mxu0 0.0
    %897 = vmatpush1.msra.mxu0 0.0
    %898 = vmatprep.subr.mxu0 0.0
    %899 = vmatpush1.msra.mxu0 0.0
    %900 = vmatprep.subr.mxu0 0.0
    %901 = vmatpush1.msra.mxu0 %v871
    %902 = vmatprep.subr.mxu0 0.0
    %903 = vmatpush1.msra.mxu0 %v870
    %904 = vmatprep.subr.mxu0 0.0
    %905 = vmatpush1.msra.mxu0 %v869
    %906 = vmatprep.subr.mxu0 0.0
    %907 = vmatpush1.msra.mxu0 %v868
    %908 = vmatprep.subr.mxu0 0.0
    %909 = vmatpush1.msra.mxu0 %v867
    %910 = vmatprep.subr.mxu0 0.0
    %911 = vmatpush1.msra.mxu0 %v866
    %912 = vmatprep.subr.mxu0 0.0
    %913 = vmatpush1.msra.mxu0 %v865
    %914 = vmatprep.subr.mxu0 0.0
    %915 = vmatpush1.msra.mxu0 %v864
    %916 = vmatprep.subr.mxu0 0.0
    %917 = vmatpush2.msra.mxu0 0.0
    %918 = vmatprep.subr.mxu0 0.0
    %919 = vmatpush2.msra.mxu0 0.0
    %920 = vmatprep.subr.mxu0 0.0
    %921 = vmatpush2.msra.mxu0 0.0
    %922 = vmatprep.subr.mxu0 0.0
    %923 = vmatpush2.msra.mxu0 0.0
    %924 = vmatprep.subr.mxu0 0.0
    %925 = vmatpush2.msra.mxu0 0.0
    %926 = vmatprep.subr.mxu0 0.0
    %927 = vmatpush2.msra.mxu0 0.0
    %928 = vmatprep.subr.mxu0 0.0
    %929 = vmatpush2.msra.mxu0 0.0
    %930 = vmatprep.subr.mxu0 0.0
    %931 = vmatpush2.msra.mxu0 0.0
    %932 = vmatprep.subr.mxu0 0.0
    %933 = vmatpush2.msra.mxu0 0.0
    %934 = vmatprep.subr.mxu0 0.0
    %935 = vmatpush2.msra.mxu0 0.0
    %936 = vmatprep.subr.mxu0 0.0
    %937 = vmatpush2.msra.mxu0 0.0
    %938 = vmatprep.subr.mxu0 0.0
    %939 = vmatpush2.msra.mxu0 0.0
    %940 = vmatprep.subr.mxu0 0.0
    %941 = vmatpush2.msra.mxu0 0.0
    %942 = vmatprep.subr.mxu0 0.0
    %943 = vmatpush2.msra.mxu0 0.0
    %944 = vmatprep.subr.mxu0 0.0
    %945 = vmatpush2.msra.mxu0 0.0
    %946 = vmatprep.subr.mxu0 0.0
    %947 = vmatpush2.msra.mxu0 0.0
    %948 = vmatprep.mubr.f32.mxu0 0.0
    %949 = vmatmul.mubr.f32.gmra.mxu0 %v879
    %v950 = vpop.f32.mrf.mxu0
    %v951 = vadd.f32 0.0, %v950
    %v952 = vpop.f32.mrf.mxu0
    %953 = vmatprep.mubr.f32.mxu0 0.0
    %954 = vmatmul.mubr.f32.gmra.mxu0 %v882
    %v955 = vpop.f32.mrf.mxu0
    %v956 = vadd.f32 0.0, %v955
    %v957 = vpop.f32.mrf.mxu0
    %958 = vdwg.mxu0
    %960 = vset.pattern.permute.xlu0 0
    %961 = vperm.xlu0 %960, %v876
    %v962 = vpop.permute.xlu0 %961
    %965 = vset.pattern.permute.xlu0 0
    %966 = vperm.xlu0 %965, %v877
    %v967 = vpop.permute.xlu0 %966
    %v970 = vsel %vm216, %v951, 0
    %v973 = vsel %vm216, %v956, 0
    %975 = vmatprep.subr.mxu0 0.0
    %976 = vmatpush1.msra.mxu0 0.0
    %977 = vmatprep.subr.mxu0 0.0
    %978 = vmatpush1.msra.mxu0 0.0
    %979 = vmatprep.subr.mxu0 0.0
    %980 = vmatpush1.msra.mxu0 0.0
    %981 = vmatprep.subr.mxu0 0.0
    %982 = vmatpush1.msra.mxu0 0.0
    %983 = vmatprep.subr.mxu0 0.0
    %984 = vmatpush1.msra.mxu0 0.0
    %985 = vmatprep.subr.mxu0 0.0
    %986 = vmatpush1.msra.mxu0 0.0
    %987 = vmatprep.subr.mxu0 0.0
    %988 = vmatpush1.msra.mxu0 0.0
    %989 = vmatprep.subr.mxu0 0.0
    %990 = vmatpush1.msra.mxu0 0.0
    %991 = vmatprep.subr.mxu0 0.0
    %992 = vmatpush1.msra.mxu0 0.0
    %993 = vmatprep.subr.mxu0 0.0
    %994 = vmatpush1.msra.mxu0 0.0
    %995 = vmatprep.subr.mxu0 0.0
    %996 = vmatpush1.msra.mxu0 0.0
    %997 = vmatprep.subr.mxu0 0.0
    %998 = vmatpush1.msra.mxu0 0.0
    %999 = vmatprep.subr.mxu0 0.0
    %1000 = vmatpush1.msra.mxu0 0.0
    %1001 = vmatprep.subr.mxu0 0.0
    %1002 = vmatpush1.msra.mxu0 0.0
    %1003 = vmatprep.subr.mxu0 0.0
    %1004 = vmatpush1.msra.mxu0 %v27
    %1005 = vmatprep.subr.mxu0 0.0
    %1006 = vmatpush1.msra.mxu0 %v26
    %1007 = vmatprep.subr.mxu0 0.0
    %1008 = vmatpush2.msra.mxu0 0.0
    %1009 = vmatprep.subr.mxu0 0.0
    %1010 = vmatpush2.msra.mxu0 0.0
    %1011 = vmatprep.subr.mxu0 0.0
    %1012 = vmatpush2.msra.mxu0 0.0
    %1013 = vmatprep.subr.mxu0 0.0
    %1014 = vmatpush2.msra.mxu0 0.0
    %1015 = vmatprep.subr.mxu0 0.0
    %1016 = vmatpush2.msra.mxu0 0.0
    %1017 = vmatprep.subr.mxu0 0.0
    %1018 = vmatpush2.msra.mxu0 0.0
    %1019 = vmatprep.subr.mxu0 0.0
    %1020 = vmatpush2.msra.mxu0 0.0
    %1021 = vmatprep.subr.mxu0 0.0
    %1022 = vmatpush2.msra.mxu0 0.0
    %1023 = vmatprep.subr.mxu0 0.0
    %1024 = vmatpush2.msra.mxu0 0.0
    %1025 = vmatprep.subr.mxu0 0.0
    %1026 = vmatpush2.msra.mxu0 0.0
    %1027 = vmatprep.subr.mxu0 0.0
    %1028 = vmatpush2.msra.mxu0 0.0
    %1029 = vmatprep.subr.mxu0 0.0
    %1030 = vmatpush2.msra.mxu0 0.0
    %1031 = vmatprep.subr.mxu0 0.0
    %1032 = vmatpush2.msra.mxu0 0.0
    %1033 = vmatprep.subr.mxu0 0.0
    %1034 = vmatpush2.msra.mxu0 0.0
    %1035 = vmatprep.subr.mxu0 0.0
    %1036 = vmatpush2.msra.mxu0 0.0
    %1037 = vmatprep.subr.mxu0 0.0
    %1038 = vmatpush2.msra.mxu0 0.0
    %1039 = vmatprep.mubr.f32.mxu0 0.0
    %1040 = vmatmul.mubr.f32.gmra.mxu0 %v970
    %v1041 = vpop.f32.mrf.mxu0
    %v1042 = vadd.f32 %v962, %v1041
    %v1043 = vpop.f32.mrf.mxu0
    %1044 = vmatprep.mubr.f32.mxu0 0.0
    %1045 = vmatmul.mubr.f32.gmra.mxu0 %v973
    %v1046 = vpop.f32.mrf.mxu0
    %v1047 = vadd.f32 %v967, %v1046
    %v1048 = vpop.f32.mrf.mxu0
    %1049 = vdwg.mxu0
    %v1050 = vxor.u32 %v1042, 2147483648
    %v1051 = vmul.f32 %v1050, 1.442695
    %v1052 = vpow.pop %v1051
    %v1053 = vadd.f32 %v1052, 1.0
    %v1054 = vrcp.pop %v1053
    %v1055 = vmul.f32 1.0, %v1054
    %v1056 = vxor.u32 %v1047, 2147483648
    %v1057 = vmul.f32 %v1056, 1.442695
    %v1058 = vpow.pop %v1057
    %v1059 = vadd.f32 %v1058, 1.0
    %v1060 = vrcp.pop %v1059
    %v1061 = vmul.f32 1.0, %v1060
    %v1062 = vadd.f32 %v543, %v1055
    %v1063 = vmul.f32 %v1055, 1.442695
    %v1064 = vpow.pop %v1063
    %v1065 = vmul.f32 %v28, %v1064
    %v1066 = vadd.f32 %v1065, %v1061
    %s1067 = scalar_lea.vmem %s2, 128
    %v1068 = vld [vmem:[%s1067] sm:$0xff]
    %v1069 = vld [vmem:[%s1067 + $0x8] sm:$0xff]
    %v1070 = vld [vmem:[%s1067 + $0x10] sm:$0xff]
    %v1071 = vld [vmem:[%s1067 + $0x18] sm:$0xff]
    %v1072 = vld [vmem:[%s1067 + $0x20] sm:$0xff]
    %v1073 = vld [vmem:[%s1067 + $0x28] sm:$0xff]
    %v1074 = vld [vmem:[%s1067 + $0x30] sm:$0xff]
    %v1075 = vld [vmem:[%s1067 + $0x38] sm:$0xff]
    %s1076 = scalar_lea.vmem %s4, 128
    %v1077 = vld [vmem:[%s1076] sm:$0xff]
    %v1078 = vld [vmem:[%s1076 + $0x8] sm:$0xff]
    %v1079 = vld [vmem:[%s1076 + $0x10] sm:$0xff]
    %v1080 = vld [vmem:[%s1076 + $0x18] sm:$0xff]
    %v1081 = vld [vmem:[%s1076 + $0x20] sm:$0xff]
    %v1082 = vld [vmem:[%s1076 + $0x28] sm:$0xff]
    %v1083 = vld [vmem:[%s1076 + $0x30] sm:$0xff]
    %v1084 = vld [vmem:[%s1076 + $0x38] sm:$0xff]
    %v1086 = vsel %vm46, %v1068, 0
    %v1089 = vsel %vm46, %v1069, 0
    %v1092 = vsel %vm46, %v1070, 0
    %v1095 = vsel %vm46, %v1071, 0
    %v1098 = vsel %vm46, %v1072, 0
    %v1101 = vsel %vm46, %v1073, 0
    %v1104 = vsel %vm46, %v1074, 0
    %v1107 = vsel %vm46, %v1075, 0
    %1109 = vmatprep.subr.mxu0 0.0
    %1110 = vmatpush1.msra.mxu0 0.0
    %1111 = vmatprep.subr.mxu0 0.0
    %1112 = vmatpush1.msra.mxu0 0.0
    %1113 = vmatprep.subr.mxu0 0.0
    %1114 = vmatpush1.msra.mxu0 0.0
    %1115 = vmatprep.subr.mxu0 0.0
    %1116 = vmatpush1.msra.mxu0 0.0
    %1117 = vmatprep.subr.mxu0 0.0
    %1118 = vmatpush1.msra.mxu0 0.0
    %1119 = vmatprep.subr.mxu0 0.0
    %1120 = vmatpush1.msra.mxu0 0.0
    %1121 = vmatprep.subr.mxu0 0.0
    %1122 = vmatpush1.msra.mxu0 0.0
    %1123 = vmatprep.subr.mxu0 0.0
    %1124 = vmatpush1.msra.mxu0 0.0
    %1125 = vmatprep.subr.mxu0 0.0
    %1126 = vmatpush1.msra.mxu0 0.0
    %1127 = vmatprep.subr.mxu0 0.0
    %1128 = vmatpush1.msra.mxu0 0.0
    %1129 = vmatprep.subr.mxu0 0.0
    %1130 = vmatpush1.msra.mxu0 0.0
    %1131 = vmatprep.subr.mxu0 0.0
    %1132 = vmatpush1.msra.mxu0 0.0
    %1133 = vmatprep.subr.mxu0 0.0
    %1134 = vmatpush1.msra.mxu0 0.0
    %1135 = vmatprep.subr.mxu0 0.0
    %1136 = vmatpush1.msra.mxu0 0.0
    %1137 = vmatprep.subr.mxu0 0.0
    %1138 = vmatpush1.msra.mxu0 0.0
    %1139 = vmatprep.subr.mxu0 0.0
    %1140 = vmatpush1.msra.mxu0 %v1066
    %1141 = vmatprep.subr.mxu0 0.0
    %1142 = vmatpush2.msra.mxu0 0.0
    %1143 = vmatprep.subr.mxu0 0.0
    %1144 = vmatpush2.msra.mxu0 0.0
    %1145 = vmatprep.subr.mxu0 0.0
    %1146 = vmatpush2.msra.mxu0 0.0
    %1147 = vmatprep.subr.mxu0 0.0
    %1148 = vmatpush2.msra.mxu0 0.0
    %1149 = vmatprep.subr.mxu0 0.0
    %1150 = vmatpush2.msra.mxu0 0.0
    %1151 = vmatprep.subr.mxu0 0.0
    %1152 = vmatpush2.msra.mxu0 0.0
    %1153 = vmatprep.subr.mxu0 0.0
    %1154 = vmatpush2.msra.mxu0 0.0
    %1155 = vmatprep.subr.mxu0 0.0
    %1156 = vmatpush2.msra.mxu0 0.0
    %1157 = vmatprep.subr.mxu0 0.0
    %1158 = vmatpush2.msra.mxu0 0.0
    %1159 = vmatprep.subr.mxu0 0.0
    %1160 = vmatpush2.msra.mxu0 0.0
    %1161 = vmatprep.subr.mxu0 0.0
    %1162 = vmatpush2.msra.mxu0 0.0
    %1163 = vmatprep.subr.mxu0 0.0
    %1164 = vmatpush2.msra.mxu0 0.0
    %1165 = vmatprep.subr.mxu0 0.0
    %1166 = vmatpush2.msra.mxu0 0.0
    %1167 = vmatprep.subr.mxu0 0.0
    %1168 = vmatpush2.msra.mxu0 0.0
    %1169 = vmatprep.subr.mxu0 0.0
    %1170 = vmatpush2.msra.mxu0 0.0
    %1171 = vmatprep.subr.mxu0 0.0
    %1172 = vmatpush2.msra.mxu0 0.0
    %1173 = vmatprep.mubr.f32.mxu0 0.0
    %1174 = vmatmul.mubr.f32.gmra.mxu0 %v1086
    %v1175 = vpop.f32.mrf.mxu0
    %v1176 = vadd.f32 0.0, %v1175
    %v1177 = vpop.f32.mrf.mxu0
    %1178 = vmatprep.mubr.f32.mxu0 0.0
    %1179 = vmatmul.mubr.f32.gmra.mxu0 %v1089
    %v1180 = vpop.f32.mrf.mxu0
    %v1181 = vadd.f32 0.0, %v1180
    %v1182 = vpop.f32.mrf.mxu0
    %1183 = vmatprep.mubr.f32.mxu0 0.0
    %1184 = vmatmul.mubr.f32.gmra.mxu0 %v1092
    %v1185 = vpop.f32.mrf.mxu0
    %v1186 = vadd.f32 0.0, %v1185
    %v1187 = vpop.f32.mrf.mxu0
    %1188 = vmatprep.mubr.f32.mxu0 0.0
    %1189 = vmatmul.mubr.f32.gmra.mxu0 %v1095
    %v1190 = vpop.f32.mrf.mxu0
    %v1191 = vadd.f32 0.0, %v1190
    %v1192 = vpop.f32.mrf.mxu0
    %1193 = vmatprep.mubr.f32.mxu0 0.0
    %1194 = vmatmul.mubr.f32.gmra.mxu0 %v1098
    %v1195 = vpop.f32.mrf.mxu0
    %v1196 = vadd.f32 0.0, %v1195
    %v1197 = vpop.f32.mrf.mxu0
    %1198 = vmatprep.mubr.f32.mxu0 0.0
    %1199 = vmatmul.mubr.f32.gmra.mxu0 %v1101
    %v1200 = vpop.f32.mrf.mxu0
    %v1201 = vadd.f32 0.0, %v1200
    %v1202 = vpop.f32.mrf.mxu0
    %1203 = vmatprep.mubr.f32.mxu0 0.0
    %1204 = vmatmul.mubr.f32.gmra.mxu0 %v1104
    %v1205 = vpop.f32.mrf.mxu0
    %v1206 = vadd.f32 0.0, %v1205
    %v1207 = vpop.f32.mrf.mxu0
    %1208 = vmatprep.mubr.f32.mxu0 0.0
    %1209 = vmatmul.mubr.f32.gmra.mxu0 %v1107
    %v1210 = vpop.f32.mrf.mxu0
    %v1211 = vadd.f32 0.0, %v1210
    %v1212 = vpop.f32.mrf.mxu0
    %1213 = vdwg.mxu0
    %1215 = vset.pattern.permute.xlu0 0
    %1216 = vperm.xlu0 %1215, %v1077
    %v1217 = vpop.permute.xlu0 %1216
    %1220 = vset.pattern.permute.xlu0 0
    %1221 = vperm.xlu0 %1220, %v1078
    %v1222 = vpop.permute.xlu0 %1221
    %1225 = vset.pattern.permute.xlu0 0
    %1226 = vperm.xlu0 %1225, %v1079
    %v1227 = vpop.permute.xlu0 %1226
    %1230 = vset.pattern.permute.xlu0 0
    %1231 = vperm.xlu0 %1230, %v1080
    %v1232 = vpop.permute.xlu0 %1231
    %1235 = vset.pattern.permute.xlu0 0
    %1236 = vperm.xlu0 %1235, %v1081
    %v1237 = vpop.permute.xlu0 %1236
    %1240 = vset.pattern.permute.xlu0 0
    %1241 = vperm.xlu0 %1240, %v1082
    %v1242 = vpop.permute.xlu0 %1241
    %1245 = vset.pattern.permute.xlu0 0
    %1246 = vperm.xlu0 %1245, %v1083
    %v1247 = vpop.permute.xlu0 %1246
    %1250 = vset.pattern.permute.xlu0 0
    %1251 = vperm.xlu0 %1250, %v1084
    %v1252 = vpop.permute.xlu0 %1251
    %v1255 = vsel %vm216, %v1176, 0
    %v1258 = vsel %vm216, %v1181, 0
    %v1261 = vsel %vm216, %v1186, 0
    %v1264 = vsel %vm216, %v1191, 0
    %v1267 = vsel %vm216, %v1196, 0
    %v1270 = vsel %vm216, %v1201, 0
    %v1273 = vsel %vm216, %v1206, 0
    %v1276 = vsel %vm216, %v1211, 0
    %1278 = vmatprep.subr.mxu0 0.0
    %1279 = vmatpush1.msra.mxu0 0.0
    %1280 = vmatprep.subr.mxu0 0.0
    %1281 = vmatpush1.msra.mxu0 0.0
    %1282 = vmatprep.subr.mxu0 0.0
    %1283 = vmatpush1.msra.mxu0 0.0
    %1284 = vmatprep.subr.mxu0 0.0
    %1285 = vmatpush1.msra.mxu0 0.0
    %1286 = vmatprep.subr.mxu0 0.0
    %1287 = vmatpush1.msra.mxu0 0.0
    %1288 = vmatprep.subr.mxu0 0.0
    %1289 = vmatpush1.msra.mxu0 0.0
    %1290 = vmatprep.subr.mxu0 0.0
    %1291 = vmatpush1.msra.mxu0 0.0
    %1292 = vmatprep.subr.mxu0 0.0
    %1293 = vmatpush1.msra.mxu0 0.0
    %1294 = vmatprep.subr.mxu0 0.0
    %1295 = vmatpush1.msra.mxu0 0.0
    %1296 = vmatprep.subr.mxu0 0.0
    %1297 = vmatpush1.msra.mxu0 0.0
    %1298 = vmatprep.subr.mxu0 0.0
    %1299 = vmatpush1.msra.mxu0 0.0
    %1300 = vmatprep.subr.mxu0 0.0
    %1301 = vmatpush1.msra.mxu0 0.0
    %1302 = vmatprep.subr.mxu0 0.0
    %1303 = vmatpush1.msra.mxu0 0.0
    %1304 = vmatprep.subr.mxu0 0.0
    %1305 = vmatpush1.msra.mxu0 0.0
    %1306 = vmatprep.subr.mxu0 0.0
    %1307 = vmatpush1.msra.mxu0 %v27
    %1308 = vmatprep.subr.mxu0 0.0
    %1309 = vmatpush1.msra.mxu0 %v26
    %1310 = vmatprep.subr.mxu0 0.0
    %1311 = vmatpush2.msra.mxu0 0.0
    %1312 = vmatprep.subr.mxu0 0.0
    %1313 = vmatpush2.msra.mxu0 0.0
    %1314 = vmatprep.subr.mxu0 0.0
    %1315 = vmatpush2.msra.mxu0 0.0
    %1316 = vmatprep.subr.mxu0 0.0
    %1317 = vmatpush2.msra.mxu0 0.0
    %1318 = vmatprep.subr.mxu0 0.0
    %1319 = vmatpush2.msra.mxu0 0.0
    %1320 = vmatprep.subr.mxu0 0.0
    %1321 = vmatpush2.msra.mxu0 0.0
    %1322 = vmatprep.subr.mxu0 0.0
    %1323 = vmatpush2.msra.mxu0 0.0
    %1324 = vmatprep.subr.mxu0 0.0
    %1325 = vmatpush2.msra.mxu0 0.0
    %1326 = vmatprep.subr.mxu0 0.0
    %1327 = vmatpush2.msra.mxu0 0.0
    %1328 = vmatprep.subr.mxu0 0.0
    %1329 = vmatpush2.msra.mxu0 0.0
    %1330 = vmatprep.subr.mxu0 0.0
    %1331 = vmatpush2.msra.mxu0 0.0
    %1332 = vmatprep.subr.mxu0 0.0
    %1333 = vmatpush2.msra.mxu0 0.0
    %1334 = vmatprep.subr.mxu0 0.0
    %1335 = vmatpush2.msra.mxu0 0.0
    %1336 = vmatprep.subr.mxu0 0.0
    %1337 = vmatpush2.msra.mxu0 0.0
    %1338 = vmatprep.subr.mxu0 0.0
    %1339 = vmatpush2.msra.mxu0 0.0
    %1340 = vmatprep.subr.mxu0 0.0
    %1341 = vmatpush2.msra.mxu0 0.0
    %1342 = vmatprep.mubr.f32.mxu0 0.0
    %1343 = vmatmul.mubr.f32.gmra.mxu0 %v1255
    %v1344 = vpop.f32.mrf.mxu0
    %v1345 = vadd.f32 %v1217, %v1344
    %v1346 = vpop.f32.mrf.mxu0
    %1347 = vmatprep.mubr.f32.mxu0 0.0
    %1348 = vmatmul.mubr.f32.gmra.mxu0 %v1258
    %v1349 = vpop.f32.mrf.mxu0
    %v1350 = vadd.f32 %v1222, %v1349
    %v1351 = vpop.f32.mrf.mxu0
    %1352 = vmatprep.mubr.f32.mxu0 0.0
    %1353 = vmatmul.mubr.f32.gmra.mxu0 %v1261
    %v1354 = vpop.f32.mrf.mxu0
    %v1355 = vadd.f32 %v1227, %v1354
    %v1356 = vpop.f32.mrf.mxu0
    %1357 = vmatprep.mubr.f32.mxu0 0.0
    %1358 = vmatmul.mubr.f32.gmra.mxu0 %v1264
    %v1359 = vpop.f32.mrf.mxu0
    %v1360 = vadd.f32 %v1232, %v1359
    %v1361 = vpop.f32.mrf.mxu0
    %1362 = vmatprep.mubr.f32.mxu0 0.0
    %1363 = vmatmul.mubr.f32.gmra.mxu0 %v1267
    %v1364 = vpop.f32.mrf.mxu0
    %v1365 = vadd.f32 %v1237, %v1364
    %v1366 = vpop.f32.mrf.mxu0
    %1367 = vmatprep.mubr.f32.mxu0 0.0
    %1368 = vmatmul.mubr.f32.gmra.mxu0 %v1270
    %v1369 = vpop.f32.mrf.mxu0
    %v1370 = vadd.f32 %v1242, %v1369
    %v1371 = vpop.f32.mrf.mxu0
    %1372 = vmatprep.mubr.f32.mxu0 0.0
    %1373 = vmatmul.mubr.f32.gmra.mxu0 %v1273
    %v1374 = vpop.f32.mrf.mxu0
    %v1375 = vadd.f32 %v1247, %v1374
    %v1376 = vpop.f32.mrf.mxu0
    %1377 = vmatprep.mubr.f32.mxu0 0.0
    %1378 = vmatmul.mubr.f32.gmra.mxu0 %v1276
    %v1379 = vpop.f32.mrf.mxu0
    %v1380 = vadd.f32 %v1252, %v1379
    %v1381 = vpop.f32.mrf.mxu0
    %1382 = vdwg.mxu0
    %v1383 = vmax.f32 %v1345, 0.0
    %v1384 = vmax.f32 %v1350, 0.0
    %v1385 = vmax.f32 %v1355, 0.0
    %v1386 = vmax.f32 %v1360, 0.0
    %v1387 = vmax.f32 %v1365, 0.0
    %v1388 = vmax.f32 %v1370, 0.0
    %v1389 = vmax.f32 %v1375, 0.0
    %v1390 = vmax.f32 %v1380, 0.0
    %s1391 = scalar_lea.vmem %s3, 32
    %v1392 = vld [vmem:[%s1391] sm:$0xff]
    %v1393 = vld [vmem:[%s1391 + $0x8] sm:$0xff]
    %s1394 = scalar_lea.vmem %s5, 32
    %v1395 = vld [vmem:[%s1394] sm:$0xff]
    %v1396 = vld [vmem:[%s1394 + $0x8] sm:$0xff]
    %v1398 = vsel %vm358, %v1392, 0
    %v1401 = vsel %vm358, %v1393, 0
    %1403 = vmatprep.subr.mxu0 0.0
    %1404 = vmatpush1.msra.mxu0 0.0
    %1405 = vmatprep.subr.mxu0 0.0
    %1406 = vmatpush1.msra.mxu0 0.0
    %1407 = vmatprep.subr.mxu0 0.0
    %1408 = vmatpush1.msra.mxu0 0.0
    %1409 = vmatprep.subr.mxu0 0.0
    %1410 = vmatpush1.msra.mxu0 0.0
    %1411 = vmatprep.subr.mxu0 0.0
    %1412 = vmatpush1.msra.mxu0 0.0
    %1413 = vmatprep.subr.mxu0 0.0
    %1414 = vmatpush1.msra.mxu0 0.0
    %1415 = vmatprep.subr.mxu0 0.0
    %1416 = vmatpush1.msra.mxu0 0.0
    %1417 = vmatprep.subr.mxu0 0.0
    %1418 = vmatpush1.msra.mxu0 0.0
    %1419 = vmatprep.subr.mxu0 0.0
    %1420 = vmatpush1.msra.mxu0 %v1390
    %1421 = vmatprep.subr.mxu0 0.0
    %1422 = vmatpush1.msra.mxu0 %v1389
    %1423 = vmatprep.subr.mxu0 0.0
    %1424 = vmatpush1.msra.mxu0 %v1388
    %1425 = vmatprep.subr.mxu0 0.0
    %1426 = vmatpush1.msra.mxu0 %v1387
    %1427 = vmatprep.subr.mxu0 0.0
    %1428 = vmatpush1.msra.mxu0 %v1386
    %1429 = vmatprep.subr.mxu0 0.0
    %1430 = vmatpush1.msra.mxu0 %v1385
    %1431 = vmatprep.subr.mxu0 0.0
    %1432 = vmatpush1.msra.mxu0 %v1384
    %1433 = vmatprep.subr.mxu0 0.0
    %1434 = vmatpush1.msra.mxu0 %v1383
    %1435 = vmatprep.subr.mxu0 0.0
    %1436 = vmatpush2.msra.mxu0 0.0
    %1437 = vmatprep.subr.mxu0 0.0
    %1438 = vmatpush2.msra.mxu0 0.0
    %1439 = vmatprep.subr.mxu0 0.0
    %1440 = vmatpush2.msra.mxu0 0.0
    %1441 = vmatprep.subr.mxu0 0.0
    %1442 = vmatpush2.msra.mxu0 0.0
    %1443 = vmatprep.subr.mxu0 0.0
    %1444 = vmatpush2.msra.mxu0 0.0
    %1445 = vmatprep.subr.mxu0 0.0
    %1446 = vmatpush2.msra.mxu0 0.0
    %1447 = vmatprep.subr.mxu0 0.0
    %1448 = vmatpush2.msra.mxu0 0.0
    %1449 = vmatprep.subr.mxu0 0.0
    %1450 = vmatpush2.msra.mxu0 0.0
    %1451 = vmatprep.subr.mxu0 0.0
    %1452 = vmatpush2.msra.mxu0 0.0
    %1453 = vmatprep.subr.mxu0 0.0
    %1454 = vmatpush2.msra.mxu0 0.0
    %1455 = vmatprep.subr.mxu0 0.0
    %1456 = vmatpush2.msra.mxu0 0.0
    %1457 = vmatprep.subr.mxu0 0.0
    %1458 = vmatpush2.msra.mxu0 0.0
    %1459 = vmatprep.subr.mxu0 0.0
    %1460 = vmatpush2.msra.mxu0 0.0
    %1461 = vmatprep.subr.mxu0 0.0
    %1462 = vmatpush2.msra.mxu0 0.0
    %1463 = vmatprep.subr.mxu0 0.0
    %1464 = vmatpush2.msra.mxu0 0.0
    %1465 = vmatprep.subr.mxu0 0.0
    %1466 = vmatpush2.msra.mxu0 0.0
    %1467 = vmatprep.mubr.f32.mxu0 0.0
    %1468 = vmatmul.mubr.f32.gmra.mxu0 %v1398
    %v1469 = vpop.f32.mrf.mxu0
    %v1470 = vadd.f32 0.0, %v1469
    %v1471 = vpop.f32.mrf.mxu0
    %1472 = vmatprep.mubr.f32.mxu0 0.0
    %1473 = vmatmul.mubr.f32.gmra.mxu0 %v1401
    %v1474 = vpop.f32.mrf.mxu0
    %v1475 = vadd.f32 0.0, %v1474
    %v1476 = vpop.f32.mrf.mxu0
    %1477 = vdwg.mxu0
    %1479 = vset.pattern.permute.xlu0 0
    %1480 = vperm.xlu0 %1479, %v1395
    %v1481 = vpop.permute.xlu0 %1480
    %1484 = vset.pattern.permute.xlu0 0
    %1485 = vperm.xlu0 %1484, %v1396
    %v1486 = vpop.permute.xlu0 %1485
    %v1489 = vsel %vm216, %v1470, 0
    %v1492 = vsel %vm216, %v1475, 0
    %1494 = vmatprep.subr.mxu0 0.0
    %1495 = vmatpush1.msra.mxu0 0.0
    %1496 = vmatprep.subr.mxu0 0.0
    %1497 = vmatpush1.msra.mxu0 0.0
    %1498 = vmatprep.subr.mxu0 0.0
    %1499 = vmatpush1.msra.mxu0 0.0
    %1500 = vmatprep.subr.mxu0 0.0
    %1501 = vmatpush1.msra.mxu0 0.0
    %1502 = vmatprep.subr.mxu0 0.0
    %1503 = vmatpush1.msra.mxu0 0.0
    %1504 = vmatprep.subr.mxu0 0.0
    %1505 = vmatpush1.msra.mxu0 0.0
    %1506 = vmatprep.subr.mxu0 0.0
    %1507 = vmatpush1.msra.mxu0 0.0
    %1508 = vmatprep.subr.mxu0 0.0
    %1509 = vmatpush1.msra.mxu0 0.0
    %1510 = vmatprep.subr.mxu0 0.0
    %1511 = vmatpush1.msra.mxu0 0.0
    %1512 = vmatprep.subr.mxu0 0.0
    %1513 = vmatpush1.msra.mxu0 0.0
    %1514 = vmatprep.subr.mxu0 0.0
    %1515 = vmatpush1.msra.mxu0 0.0
    %1516 = vmatprep.subr.mxu0 0.0
    %1517 = vmatpush1.msra.mxu0 0.0
    %1518 = vmatprep.subr.mxu0 0.0
    %1519 = vmatpush1.msra.mxu0 0.0
    %1520 = vmatprep.subr.mxu0 0.0
    %1521 = vmatpush1.msra.mxu0 0.0
    %1522 = vmatprep.subr.mxu0 0.0
    %1523 = vmatpush1.msra.mxu0 %v27
    %1524 = vmatprep.subr.mxu0 0.0
    %1525 = vmatpush1.msra.mxu0 %v26
    %1526 = vmatprep.subr.mxu0 0.0
    %1527 = vmatpush2.msra.mxu0 0.0
    %1528 = vmatprep.subr.mxu0 0.0
    %1529 = vmatpush2.msra.mxu0 0.0
    %1530 = vmatprep.subr.mxu0 0.0
    %1531 = vmatpush2.msra.mxu0 0.0
    %1532 = vmatprep.subr.mxu0 0.0
    %1533 = vmatpush2.msra.mxu0 0.0
    %1534 = vmatprep.subr.mxu0 0.0
    %1535 = vmatpush2.msra.mxu0 0.0
    %1536 = vmatprep.subr.mxu0 0.0
    %1537 = vmatpush2.msra.mxu0 0.0
    %1538 = vmatprep.subr.mxu0 0.0
    %1539 = vmatpush2.msra.mxu0 0.0
    %1540 = vmatprep.subr.mxu0 0.0
    %1541 = vmatpush2.msra.mxu0 0.0
    %1542 = vmatprep.subr.mxu0 0.0
    %1543 = vmatpush2.msra.mxu0 0.0
    %1544 = vmatprep.subr.mxu0 0.0
    %1545 = vmatpush2.msra.mxu0 0.0
    %1546 = vmatprep.subr.mxu0 0.0
    %1547 = vmatpush2.msra.mxu0 0.0
    %1548 = vmatprep.subr.mxu0 0.0
    %1549 = vmatpush2.msra.mxu0 0.0
    %1550 = vmatprep.subr.mxu0 0.0
    %1551 = vmatpush2.msra.mxu0 0.0
    %1552 = vmatprep.subr.mxu0 0.0
    %1553 = vmatpush2.msra.mxu0 0.0
    %1554 = vmatprep.subr.mxu0 0.0
    %1555 = vmatpush2.msra.mxu0 0.0
    %1556 = vmatprep.subr.mxu0 0.0
    %1557 = vmatpush2.msra.mxu0 0.0
    %1558 = vmatprep.mubr.f32.mxu0 0.0
    %1559 = vmatmul.mubr.f32.gmra.mxu0 %v1489
    %v1560 = vpop.f32.mrf.mxu0
    %v1561 = vadd.f32 %v1481, %v1560
    %v1562 = vpop.f32.mrf.mxu0
    %1563 = vmatprep.mubr.f32.mxu0 0.0
    %1564 = vmatmul.mubr.f32.gmra.mxu0 %v1492
    %v1565 = vpop.f32.mrf.mxu0
    %v1566 = vadd.f32 %v1486, %v1565
    %v1567 = vpop.f32.mrf.mxu0
    %1568 = vdwg.mxu0
    %v1569 = vxor.u32 %v1561, 2147483648
    %v1570 = vmul.f32 %v1569, 1.442695
    %v1571 = vpow.pop %v1570
    %v1572 = vadd.f32 %v1571, 1.0
    %v1573 = vrcp.pop %v1572
    %v1574 = vmul.f32 1.0, %v1573
    %v1575 = vxor.u32 %v1566, 2147483648
    %v1576 = vmul.f32 %v1575, 1.442695
    %v1577 = vpow.pop %v1576
    %v1578 = vadd.f32 %v1577, 1.0
    %v1579 = vrcp.pop %v1578
    %v1580 = vmul.f32 1.0, %v1579
    %v1581 = vadd.f32 %v1062, %v1574
    %v1582 = vmul.f32 %v1574, 1.442695
    %v1583 = vpow.pop %v1582
    %v1584 = vmul.f32 %v547, %v1583
    %v1585 = vadd.f32 %v1584, %v1580
    %s1586 = scalar_lea.vmem %s2, 192
    %v1587 = vld [vmem:[%s1586] sm:$0xff]
    %v1588 = vld [vmem:[%s1586 + $0x8] sm:$0xff]
    %v1589 = vld [vmem:[%s1586 + $0x10] sm:$0xff]
    %v1590 = vld [vmem:[%s1586 + $0x18] sm:$0xff]
    %v1591 = vld [vmem:[%s1586 + $0x20] sm:$0xff]
    %v1592 = vld [vmem:[%s1586 + $0x28] sm:$0xff]
    %v1593 = vld [vmem:[%s1586 + $0x30] sm:$0xff]
    %v1594 = vld [vmem:[%s1586 + $0x38] sm:$0xff]
    %s1595 = scalar_lea.vmem %s4, 192
    %v1596 = vld [vmem:[%s1595] sm:$0xff]
    %v1597 = vld [vmem:[%s1595 + $0x8] sm:$0xff]
    %v1598 = vld [vmem:[%s1595 + $0x10] sm:$0xff]
    %v1599 = vld [vmem:[%s1595 + $0x18] sm:$0xff]
    %v1600 = vld [vmem:[%s1595 + $0x20] sm:$0xff]
    %v1601 = vld [vmem:[%s1595 + $0x28] sm:$0xff]
    %v1602 = vld [vmem:[%s1595 + $0x30] sm:$0xff]
    %v1603 = vld [vmem:[%s1595 + $0x38] sm:$0xff]
    %v1605 = vsel %vm46, %v1587, 0
    %v1608 = vsel %vm46, %v1588, 0
    %v1611 = vsel %vm46, %v1589, 0
    %v1614 = vsel %vm46, %v1590, 0
    %v1617 = vsel %vm46, %v1591, 0
    %v1620 = vsel %vm46, %v1592, 0
    %v1623 = vsel %vm46, %v1593, 0
    %v1626 = vsel %vm46, %v1594, 0
    %1628 = vmatprep.subr.mxu0 0.0
    %1629 = vmatpush1.msra.mxu0 0.0
    %1630 = vmatprep.subr.mxu0 0.0
    %1631 = vmatpush1.msra.mxu0 0.0
    %1632 = vmatprep.subr.mxu0 0.0
    %1633 = vmatpush1.msra.mxu0 0.0
    %1634 = vmatprep.subr.mxu0 0.0
    %1635 = vmatpush1.msra.mxu0 0.0
    %1636 = vmatprep.subr.mxu0 0.0
    %1637 = vmatpush1.msra.mxu0 0.0
    %1638 = vmatprep.subr.mxu0 0.0
    %1639 = vmatpush1.msra.mxu0 0.0
    %1640 = vmatprep.subr.mxu0 0.0
    %1641 = vmatpush1.msra.mxu0 0.0
    %1642 = vmatprep.subr.mxu0 0.0
    %1643 = vmatpush1.msra.mxu0 0.0
    %1644 = vmatprep.subr.mxu0 0.0
    %1645 = vmatpush1.msra.mxu0 0.0
    %1646 = vmatprep.subr.mxu0 0.0
    %1647 = vmatpush1.msra.mxu0 0.0
    %1648 = vmatprep.subr.mxu0 0.0
    %1649 = vmatpush1.msra.mxu0 0.0
    %1650 = vmatprep.subr.mxu0 0.0
    %1651 = vmatpush1.msra.mxu0 0.0
    %1652 = vmatprep.subr.mxu0 0.0
    %1653 = vmatpush1.msra.mxu0 0.0
    %1654 = vmatprep.subr.mxu0 0.0
    %1655 = vmatpush1.msra.mxu0 0.0
    %1656 = vmatprep.subr.mxu0 0.0
    %1657 = vmatpush1.msra.mxu0 0.0
    %1658 = vmatprep.subr.mxu0 0.0
    %1659 = vmatpush1.msra.mxu0 %v1585
    %1660 = vmatprep.subr.mxu0 0.0
    %1661 = vmatpush2.msra.mxu0 0.0
    %1662 = vmatprep.subr.mxu0 0.0
    %1663 = vmatpush2.msra.mxu0 0.0
    %1664 = vmatprep.subr.mxu0 0.0
    %1665 = vmatpush2.msra.mxu0 0.0
    %1666 = vmatprep.subr.mxu0 0.0
    %1667 = vmatpush2.msra.mxu0 0.0
    %1668 = vmatprep.subr.mxu0 0.0
    %1669 = vmatpush2.msra.mxu0 0.0
    %1670 = vmatprep.subr.mxu0 0.0
    %1671 = vmatpush2.msra.mxu0 0.0
    %1672 = vmatprep.subr.mxu0 0.0
    %1673 = vmatpush2.msra.mxu0 0.0
    %1674 = vmatprep.subr.mxu0 0.0
    %1675 = vmatpush2.msra.mxu0 0.0
    %1676 = vmatprep.subr.mxu0 0.0
    %1677 = vmatpush2.msra.mxu0 0.0
    %1678 = vmatprep.subr.mxu0 0.0
    %1679 = vmatpush2.msra.mxu0 0.0
    %1680 = vmatprep.subr.mxu0 0.0
    %1681 = vmatpush2.msra.mxu0 0.0
    %1682 = vmatprep.subr.mxu0 0.0
    %1683 = vmatpush2.msra.mxu0 0.0
    %1684 = vmatprep.subr.mxu0 0.0
    %1685 = vmatpush2.msra.mxu0 0.0
    %1686 = vmatprep.subr.mxu0 0.0
    %1687 = vmatpush2.msra.mxu0 0.0
    %1688 = vmatprep.subr.mxu0 0.0
    %1689 = vmatpush2.msra.mxu0 0.0
    %1690 = vmatprep.subr.mxu0 0.0
    %1691 = vmatpush2.msra.mxu0 0.0
    %1692 = vmatprep.mubr.f32.mxu0 0.0
    %1693 = vmatmul.mubr.f32.gmra.mxu0 %v1605
    %v1694 = vpop.f32.mrf.mxu0
    %v1695 = vadd.f32 0.0, %v1694
    %v1696 = vpop.f32.mrf.mxu0
    %1697 = vmatprep.mubr.f32.mxu0 0.0
    %1698 = vmatmul.mubr.f32.gmra.mxu0 %v1608
    %v1699 = vpop.f32.mrf.mxu0
    %v1700 = vadd.f32 0.0, %v1699
    %v1701 = vpop.f32.mrf.mxu0
    %1702 = vmatprep.mubr.f32.mxu0 0.0
    %1703 = vmatmul.mubr.f32.gmra.mxu0 %v1611
    %v1704 = vpop.f32.mrf.mxu0
    %v1705 = vadd.f32 0.0, %v1704
    %v1706 = vpop.f32.mrf.mxu0
    %1707 = vmatprep.mubr.f32.mxu0 0.0
    %1708 = vmatmul.mubr.f32.gmra.mxu0 %v1614
    %v1709 = vpop.f32.mrf.mxu0
    %v1710 = vadd.f32 0.0, %v1709
    %v1711 = vpop.f32.mrf.mxu0
    %1712 = vmatprep.mubr.f32.mxu0 0.0
    %1713 = vmatmul.mubr.f32.gmra.mxu0 %v1617
    %v1714 = vpop.f32.mrf.mxu0
    %v1715 = vadd.f32 0.0, %v1714
    %v1716 = vpop.f32.mrf.mxu0
    %1717 = vmatprep.mubr.f32.mxu0 0.0
    %1718 = vmatmul.mubr.f32.gmra.mxu0 %v1620
    %v1719 = vpop.f32.mrf.mxu0
    %v1720 = vadd.f32 0.0, %v1719
    %v1721 = vpop.f32.mrf.mxu0
    %1722 = vmatprep.mubr.f32.mxu0 0.0
    %1723 = vmatmul.mubr.f32.gmra.mxu0 %v1623
    %v1724 = vpop.f32.mrf.mxu0
    %v1725 = vadd.f32 0.0, %v1724
    %v1726 = vpop.f32.mrf.mxu0
    %1727 = vmatprep.mubr.f32.mxu0 0.0
    %1728 = vmatmul.mubr.f32.gmra.mxu0 %v1626
    %v1729 = vpop.f32.mrf.mxu0
    %v1730 = vadd.f32 0.0, %v1729
    %v1731 = vpop.f32.mrf.mxu0
    %1732 = vdwg.mxu0
    %1734 = vset.pattern.permute.xlu0 0
    %1735 = vperm.xlu0 %1734, %v1596
    %v1736 = vpop.permute.xlu0 %1735
    %1739 = vset.pattern.permute.xlu0 0
    %1740 = vperm.xlu0 %1739, %v1597
    %v1741 = vpop.permute.xlu0 %1740
    %1744 = vset.pattern.permute.xlu0 0
    %1745 = vperm.xlu0 %1744, %v1598
    %v1746 = vpop.permute.xlu0 %1745
    %1749 = vset.pattern.permute.xlu0 0
    %1750 = vperm.xlu0 %1749, %v1599
    %v1751 = vpop.permute.xlu0 %1750
    %1754 = vset.pattern.permute.xlu0 0
    %1755 = vperm.xlu0 %1754, %v1600
    %v1756 = vpop.permute.xlu0 %1755
    %1759 = vset.pattern.permute.xlu0 0
    %1760 = vperm.xlu0 %1759, %v1601
    %v1761 = vpop.permute.xlu0 %1760
    %1764 = vset.pattern.permute.xlu0 0
    %1765 = vperm.xlu0 %1764, %v1602
    %v1766 = vpop.permute.xlu0 %1765
    %1769 = vset.pattern.permute.xlu0 0
    %1770 = vperm.xlu0 %1769, %v1603
    %v1771 = vpop.permute.xlu0 %1770
    %v1774 = vsel %vm216, %v1695, 0
    %v1777 = vsel %vm216, %v1700, 0
    %v1780 = vsel %vm216, %v1705, 0
    %v1783 = vsel %vm216, %v1710, 0
    %v1786 = vsel %vm216, %v1715, 0
    %v1789 = vsel %vm216, %v1720, 0
    %v1792 = vsel %vm216, %v1725, 0
    %v1795 = vsel %vm216, %v1730, 0
    %1797 = vmatprep.subr.mxu0 0.0
    %1798 = vmatpush1.msra.mxu0 0.0
    %1799 = vmatprep.subr.mxu0 0.0
    %1800 = vmatpush1.msra.mxu0 0.0
    %1801 = vmatprep.subr.mxu0 0.0
    %1802 = vmatpush1.msra.mxu0 0.0
    %1803 = vmatprep.subr.mxu0 0.0
    %1804 = vmatpush1.msra.mxu0 0.0
    %1805 = vmatprep.subr.mxu0 0.0
    %1806 = vmatpush1.msra.mxu0 0.0
    %1807 = vmatprep.subr.mxu0 0.0
    %1808 = vmatpush1.msra.mxu0 0.0
    %1809 = vmatprep.subr.mxu0 0.0
    %1810 = vmatpush1.msra.mxu0 0.0
    %1811 = vmatprep.subr.mxu0 0.0
    %1812 = vmatpush1.msra.mxu0 0.0
    %1813 = vmatprep.subr.mxu0 0.0
    %1814 = vmatpush1.msra.mxu0 0.0
    %1815 = vmatprep.subr.mxu0 0.0
    %1816 = vmatpush1.msra.mxu0 0.0
    %1817 = vmatprep.subr.mxu0 0.0
    %1818 = vmatpush1.msra.mxu0 0.0
    %1819 = vmatprep.subr.mxu0 0.0
    %1820 = vmatpush1.msra.mxu0 0.0
    %1821 = vmatprep.subr.mxu0 0.0
    %1822 = vmatpush1.msra.mxu0 0.0
    %1823 = vmatprep.subr.mxu0 0.0
    %1824 = vmatpush1.msra.mxu0 0.0
    %1825 = vmatprep.subr.mxu0 0.0
    %1826 = vmatpush1.msra.mxu0 %v27
    %1827 = vmatprep.subr.mxu0 0.0
    %1828 = vmatpush1.msra.mxu0 %v26
    %1829 = vmatprep.subr.mxu0 0.0
    %1830 = vmatpush2.msra.mxu0 0.0
    %1831 = vmatprep.subr.mxu0 0.0
    %1832 = vmatpush2.msra.mxu0 0.0
    %1833 = vmatprep.subr.mxu0 0.0
    %1834 = vmatpush2.msra.mxu0 0.0
    %1835 = vmatprep.subr.mxu0 0.0
    %1836 = vmatpush2.msra.mxu0 0.0
    %1837 = vmatprep.subr.mxu0 0.0
    %1838 = vmatpush2.msra.mxu0 0.0
    %1839 = vmatprep.subr.mxu0 0.0
    %1840 = vmatpush2.msra.mxu0 0.0
    %1841 = vmatprep.subr.mxu0 0.0
    %1842 = vmatpush2.msra.mxu0 0.0
    %1843 = vmatprep.subr.mxu0 0.0
    %1844 = vmatpush2.msra.mxu0 0.0
    %1845 = vmatprep.subr.mxu0 0.0
    %1846 = vmatpush2.msra.mxu0 0.0
    %1847 = vmatprep.subr.mxu0 0.0
    %1848 = vmatpush2.msra.mxu0 0.0
    %1849 = vmatprep.subr.mxu0 0.0
    %1850 = vmatpush2.msra.mxu0 0.0
    %1851 = vmatprep.subr.mxu0 0.0
    %1852 = vmatpush2.msra.mxu0 0.0
    %1853 = vmatprep.subr.mxu0 0.0
    %1854 = vmatpush2.msra.mxu0 0.0
    %1855 = vmatprep.subr.mxu0 0.0
    %1856 = vmatpush2.msra.mxu0 0.0
    %1857 = vmatprep.subr.mxu0 0.0
    %1858 = vmatpush2.msra.mxu0 0.0
    %1859 = vmatprep.subr.mxu0 0.0
    %1860 = vmatpush2.msra.mxu0 0.0
    %1861 = vmatprep.mubr.f32.mxu0 0.0
    %1862 = vmatmul.mubr.f32.gmra.mxu0 %v1774
    %v1863 = vpop.f32.mrf.mxu0
    %v1864 = vadd.f32 %v1736, %v1863
    %v1865 = vpop.f32.mrf.mxu0
    %1866 = vmatprep.mubr.f32.mxu0 0.0
    %1867 = vmatmul.mubr.f32.gmra.mxu0 %v1777
    %v1868 = vpop.f32.mrf.mxu0
    %v1869 = vadd.f32 %v1741, %v1868
    %v1870 = vpop.f32.mrf.mxu0
    %1871 = vmatprep.mubr.f32.mxu0 0.0
    %1872 = vmatmul.mubr.f32.gmra.mxu0 %v1780
    %v1873 = vpop.f32.mrf.mxu0
    %v1874 = vadd.f32 %v1746, %v1873
    %v1875 = vpop.f32.mrf.mxu0
    %1876 = vmatprep.mubr.f32.mxu0 0.0
    %1877 = vmatmul.mubr.f32.gmra.mxu0 %v1783
    %v1878 = vpop.f32.mrf.mxu0
    %v1879 = vadd.f32 %v1751, %v1878
    %v1880 = vpop.f32.mrf.mxu0
    %1881 = vmatprep.mubr.f32.mxu0 0.0
    %1882 = vmatmul.mubr.f32.gmra.mxu0 %v1786
    %v1883 = vpop.f32.mrf.mxu0
    %v1884 = vadd.f32 %v1756, %v1883
    %v1885 = vpop.f32.mrf.mxu0
    %1886 = vmatprep.mubr.f32.mxu0 0.0
    %1887 = vmatmul.mubr.f32.gmra.mxu0 %v1789
    %v1888 = vpop.f32.mrf.mxu0
    %v1889 = vadd.f32 %v1761, %v1888
    %v1890 = vpop.f32.mrf.mxu0
    %1891 = vmatprep.mubr.f32.mxu0 0.0
    %1892 = vmatmul.mubr.f32.gmra.mxu0 %v1792
    %v1893 = vpop.f32.mrf.mxu0
    %v1894 = vadd.f32 %v1766, %v1893
    %v1895 = vpop.f32.mrf.mxu0
    %1896 = vmatprep.mubr.f32.mxu0 0.0
    %1897 = vmatmul.mubr.f32.gmra.mxu0 %v1795
    %v1898 = vpop.f32.mrf.mxu0
    %v1899 = vadd.f32 %v1771, %v1898
    %v1900 = vpop.f32.mrf.mxu0
    %1901 = vdwg.mxu0
    %v1902 = vmax.f32 %v1864, 0.0
    %v1903 = vmax.f32 %v1869, 0.0
    %v1904 = vmax.f32 %v1874, 0.0
    %v1905 = vmax.f32 %v1879, 0.0
    %v1906 = vmax.f32 %v1884, 0.0
    %v1907 = vmax.f32 %v1889, 0.0
    %v1908 = vmax.f32 %v1894, 0.0
    %v1909 = vmax.f32 %v1899, 0.0
    %s1910 = scalar_lea.vmem %s3, 48
    %v1911 = vld [vmem:[%s1910] sm:$0xff]
    %v1912 = vld [vmem:[%s1910 + $0x8] sm:$0xff]
    %s1913 = scalar_lea.vmem %s5, 48
    %v1914 = vld [vmem:[%s1913] sm:$0xff]
    %v1915 = vld [vmem:[%s1913 + $0x8] sm:$0xff]
    %v1917 = vsel %vm358, %v1911, 0
    %v1920 = vsel %vm358, %v1912, 0
    %1922 = vmatprep.subr.mxu0 0.0
    %1923 = vmatpush1.msra.mxu0 0.0
    %1924 = vmatprep.subr.mxu0 0.0
    %1925 = vmatpush1.msra.mxu0 0.0
    %1926 = vmatprep.subr.mxu0 0.0
    %1927 = vmatpush1.msra.mxu0 0.0
    %1928 = vmatprep.subr.mxu0 0.0
    %1929 = vmatpush1.msra.mxu0 0.0
    %1930 = vmatprep.subr.mxu0 0.0
    %1931 = vmatpush1.msra.mxu0 0.0
    %1932 = vmatprep.subr.mxu0 0.0
    %1933 = vmatpush1.msra.mxu0 0.0
    %1934 = vmatprep.subr.mxu0 0.0
    %1935 = vmatpush1.msra.mxu0 0.0
    %1936 = vmatprep.subr.mxu0 0.0
    %1937 = vmatpush1.msra.mxu0 0.0
    %1938 = vmatprep.subr.mxu0 0.0
    %1939 = vmatpush1.msra.mxu0 %v1909
    %1940 = vmatprep.subr.mxu0 0.0
    %1941 = vmatpush1.msra.mxu0 %v1908
    %1942 = vmatprep.subr.mxu0 0.0
    %1943 = vmatpush1.msra.mxu0 %v1907
    %1944 = vmatprep.subr.mxu0 0.0
    %1945 = vmatpush1.msra.mxu0 %v1906
    %1946 = vmatprep.subr.mxu0 0.0
    %1947 = vmatpush1.msra.mxu0 %v1905
    %1948 = vmatprep.subr.mxu0 0.0
    %1949 = vmatpush1.msra.mxu0 %v1904
    %1950 = vmatprep.subr.mxu0 0.0
    %1951 = vmatpush1.msra.mxu0 %v1903
    %1952 = vmatprep.subr.mxu0 0.0
    %1953 = vmatpush1.msra.mxu0 %v1902
    %1954 = vmatprep.subr.mxu0 0.0
    %1955 = vmatpush2.msra.mxu0 0.0
    %1956 = vmatprep.subr.mxu0 0.0
    %1957 = vmatpush2.msra.mxu0 0.0
    %1958 = vmatprep.subr.mxu0 0.0
    %1959 = vmatpush2.msra.mxu0 0.0
    %1960 = vmatprep.subr.mxu0 0.0
    %1961 = vmatpush2.msra.mxu0 0.0
    %1962 = vmatprep.subr.mxu0 0.0
    %1963 = vmatpush2.msra.mxu0 0.0
    %1964 = vmatprep.subr.mxu0 0.0
    %1965 = vmatpush2.msra.mxu0 0.0
    %1966 = vmatprep.subr.mxu0 0.0
    %1967 = vmatpush2.msra.mxu0 0.0
    %1968 = vmatprep.subr.mxu0 0.0
    %1969 = vmatpush2.msra.mxu0 0.0
    %1970 = vmatprep.subr.mxu0 0.0
    %1971 = vmatpush2.msra.mxu0 0.0
    %1972 = vmatprep.subr.mxu0 0.0
    %1973 = vmatpush2.msra.mxu0 0.0
    %1974 = vmatprep.subr.mxu0 0.0
    %1975 = vmatpush2.msra.mxu0 0.0
    %1976 = vmatprep.subr.mxu0 0.0
    %1977 = vmatpush2.msra.mxu0 0.0
    %1978 = vmatprep.subr.mxu0 0.0
    %1979 = vmatpush2.msra.mxu0 0.0
    %1980 = vmatprep.subr.mxu0 0.0
    %1981 = vmatpush2.msra.mxu0 0.0
    %1982 = vmatprep.subr.mxu0 0.0
    %1983 = vmatpush2.msra.mxu0 0.0
    %1984 = vmatprep.subr.mxu0 0.0
    %1985 = vmatpush2.msra.mxu0 0.0
    %1986 = vmatprep.mubr.f32.mxu0 0.0
    %1987 = vmatmul.mubr.f32.gmra.mxu0 %v1917
    %v1988 = vpop.f32.mrf.mxu0
    %v1989 = vadd.f32 0.0, %v1988
    %v1990 = vpop.f32.mrf.mxu0
    %1991 = vmatprep.mubr.f32.mxu0 0.0
    %1992 = vmatmul.mubr.f32.gmra.mxu0 %v1920
    %v1993 = vpop.f32.mrf.mxu0
    %v1994 = vadd.f32 0.0, %v1993
    %v1995 = vpop.f32.mrf.mxu0
    %1996 = vdwg.mxu0
    %1998 = vset.pattern.permute.xlu0 0
    %1999 = vperm.xlu0 %1998, %v1914
    %v2000 = vpop.permute.xlu0 %1999
    %2003 = vset.pattern.permute.xlu0 0
    %2004 = vperm.xlu0 %2003, %v1915
    %v2005 = vpop.permute.xlu0 %2004
    %v2008 = vsel %vm216, %v1989, 0
    %v2011 = vsel %vm216, %v1994, 0
    %2013 = vmatprep.subr.mxu0 0.0
    %2014 = vmatpush1.msra.mxu0 0.0
    %2015 = vmatprep.subr.mxu0 0.0
    %2016 = vmatpush1.msra.mxu0 0.0
    %2017 = vmatprep.subr.mxu0 0.0
    %2018 = vmatpush1.msra.mxu0 0.0
    %2019 = vmatprep.subr.mxu0 0.0
    %2020 = vmatpush1.msra.mxu0 0.0
    %2021 = vmatprep.subr.mxu0 0.0
    %2022 = vmatpush1.msra.mxu0 0.0
    %2023 = vmatprep.subr.mxu0 0.0
    %2024 = vmatpush1.msra.mxu0 0.0
    %2025 = vmatprep.subr.mxu0 0.0
    %2026 = vmatpush1.msra.mxu0 0.0
    %2027 = vmatprep.subr.mxu0 0.0
    %2028 = vmatpush1.msra.mxu0 0.0
    %2029 = vmatprep.subr.mxu0 0.0
    %2030 = vmatpush1.msra.mxu0 0.0
    %2031 = vmatprep.subr.mxu0 0.0
    %2032 = vmatpush1.msra.mxu0 0.0
    %2033 = vmatprep.subr.mxu0 0.0
    %2034 = vmatpush1.msra.mxu0 0.0
    %2035 = vmatprep.subr.mxu0 0.0
    %2036 = vmatpush1.msra.mxu0 0.0
    %2037 = vmatprep.subr.mxu0 0.0
    %2038 = vmatpush1.msra.mxu0 0.0
    %2039 = vmatprep.subr.mxu0 0.0
    %2040 = vmatpush1.msra.mxu0 0.0
    %2041 = vmatprep.subr.mxu0 0.0
    %2042 = vmatpush1.msra.mxu0 %v27
    %2043 = vmatprep.subr.mxu0 0.0
    %2044 = vmatpush1.msra.mxu0 %v26
    %2045 = vmatprep.subr.mxu0 0.0
    %2046 = vmatpush2.msra.mxu0 0.0
    %2047 = vmatprep.subr.mxu0 0.0
    %2048 = vmatpush2.msra.mxu0 0.0
    %2049 = vmatprep.subr.mxu0 0.0
    %2050 = vmatpush2.msra.mxu0 0.0
    %2051 = vmatprep.subr.mxu0 0.0
    %2052 = vmatpush2.msra.mxu0 0.0
    %2053 = vmatprep.subr.mxu0 0.0
    %2054 = vmatpush2.msra.mxu0 0.0
    %2055 = vmatprep.subr.mxu0 0.0
    %2056 = vmatpush2.msra.mxu0 0.0
    %2057 = vmatprep.subr.mxu0 0.0
    %2058 = vmatpush2.msra.mxu0 0.0
    %2059 = vmatprep.subr.mxu0 0.0
    %2060 = vmatpush2.msra.mxu0 0.0
    %2061 = vmatprep.subr.mxu0 0.0
    %2062 = vmatpush2.msra.mxu0 0.0
    %2063 = vmatprep.subr.mxu0 0.0
    %2064 = vmatpush2.msra.mxu0 0.0
    %2065 = vmatprep.subr.mxu0 0.0
    %2066 = vmatpush2.msra.mxu0 0.0
    %2067 = vmatprep.subr.mxu0 0.0
    %2068 = vmatpush2.msra.mxu0 0.0
    %2069 = vmatprep.subr.mxu0 0.0
    %2070 = vmatpush2.msra.mxu0 0.0
    %2071 = vmatprep.subr.mxu0 0.0
    %2072 = vmatpush2.msra.mxu0 0.0
    %2073 = vmatprep.subr.mxu0 0.0
    %2074 = vmatpush2.msra.mxu0 0.0
    %2075 = vmatprep.subr.mxu0 0.0
    %2076 = vmatpush2.msra.mxu0 0.0
    %2077 = vmatprep.mubr.f32.mxu0 0.0
    %2078 = vmatmul.mubr.f32.gmra.mxu0 %v2008
    %v2079 = vpop.f32.mrf.mxu0
    %v2080 = vadd.f32 %v2000, %v2079
    %v2081 = vpop.f32.mrf.mxu0
    %2082 = vmatprep.mubr.f32.mxu0 0.0
    %2083 = vmatmul.mubr.f32.gmra.mxu0 %v2011
    %v2084 = vpop.f32.mrf.mxu0
    %v2085 = vadd.f32 %v2005, %v2084
    %v2086 = vpop.f32.mrf.mxu0
    %2087 = vdwg.mxu0
    %v2088 = vxor.u32 %v2080, 2147483648
    %v2089 = vmul.f32 %v2088, 1.442695
    %v2090 = vpow.pop %v2089
    %v2091 = vadd.f32 %v2090, 1.0
    %v2092 = vrcp.pop %v2091
    %v2093 = vmul.f32 1.0, %v2092
    %v2094 = vxor.u32 %v2085, 2147483648
    %v2095 = vmul.f32 %v2094, 1.442695
    %v2096 = vpow.pop %v2095
    %v2097 = vadd.f32 %v2096, 1.0
    %v2098 = vrcp.pop %v2097
    %v2099 = vmul.f32 1.0, %v2098
    %v2100 = vadd.f32 %v1581, %v2093
    %v2101 = vmul.f32 %v2093, 1.442695
    %v2102 = vpow.pop %v2101
    %v2103 = vmul.f32 %v1066, %v2102
    %v2104 = vadd.f32 %v2103, %v2099
    %2105 = vst.msk [vmem:[%s6] sm:$0xff] %vm216, %v2104
    %2106 = vst.msk [vmem:[%s6 + $0x8] sm:$0xff] %vm216, %v1585
    %v2107 = vsel %vm216, %v2100, 0.0
    %2108 = vadd.xlane.f32.xlu0 %v2107
    %v2109 = vpop.xlane.xlu0 %2108
    %v2110 = vrot.slane %v2109, 4
    %v2111 = vadd.f32 %v2109, %v2110
    %v2112 = vrot.slane %v2111, 2
    %v2113 = vadd.f32 %v2111, %v2112
    %v2114 = vrot.slane %v2113, 1
    %v2115 = vadd.f32 %v2113, %v2114
    %s2116 = vtos %v2115
    %v2117 = vstv %s2116
    %vm2118 = vcmask 0
    %2119 = vst.msk [vmem:[#allocation2] sm:$0x1] %vm2118, %v2117
    // Predicated region
    $region26: #{nf_forward.1} parent=1 // pred_check
      _
    $region27: #{nf_forward.1} parent=1 // pred_check_branch
      %2121 = sbr.rel (0) target = $region29
    $region28: #{nf_forward.1} parent=1 // pred_region
      _
    $region29: #{nf_forward.1} parent=1 // pred_fallthru
      _
    // Predicated region
    $region30: #{nf_forward.1} parent=1 // pred_check
      _
    $region31: #{nf_forward.1} parent=1 // pred_check_branch
      %2123 = sbr.rel (0) target = $region33
    $region32: #{nf_forward.1} parent=1 // pred_region
      %s2125 = ssub.s32 16, 16
      %2126 = vsyncadd [#allocation3], %s2125
      %s2128 = sshll.u32 [#allocation2], 4
      %s2129 = int_to_ptr.vmem [resolvable:$true] %s2128
      %2131 = dma.vmem_to_hbm [thread:$0]  %s2129, 16, %s7, [#allocation3]
    $region33: #{nf_forward.1} parent=1 // pred_fallthru
      _
    // Predicated region
    $region34: #{nf_forward.1} parent=1 // pred_check
      _
    $region35: #{nf_forward.1} parent=1 // pred_check_branch
      %2133 = sbr.rel (0) target = $region37
    $region36: #{nf_forward.1} parent=1 // pred_region
      _
    $region37: #{nf_forward.1} parent=1 // pred_fallthru
      _
    // Predicated region
    $region38: #{nf_forward.1} parent=1 // pred_check
      _
    $region39: #{nf_forward.1} parent=1 // pred_check_branch
      %2135 = sbr.rel (0) target = $region41
    $region40: #{nf_forward.1} parent=1 // pred_region
      %2136 = dma.done [#allocation3], 16
    $region41: #{nf_forward.1} parent=1 // pred_fallthru
      _
    %2137 = vsyncpa [#allocation3], 1

</llo_original>
